<compile_context>
chip_gen: v7x
topology: tpu7x:2x2x1
jax: 0.10.0
libtpu: 0.0.40
codegen_flags: <defaults>
</compile_context>

<pallas_src>
import functools

import jax
import jax.numpy as jnp
import numpy as np
from jax import lax
from jax.experimental import pallas as pl
from jax.experimental.pallas import tpu as pltpu

LANES = 128


def _round_up(v, m):
    return (v + m - 1) // m * m


def _pad_to(a, shape):
    """Zero-pad `a` (trailing edge) up to `shape`."""
    pads = [(0, t - s) for s, t in zip(a.shape, shape)]
    return jnp.pad(a, pads)


# ---------------------------------------------------------------------------
# Pallas kernel
# ---------------------------------------------------------------------------
def _bottleneck_kernel(x_ref, w1_ref, s1_ref, b1_ref,
                       w2_ref, s2_ref, b2_ref,
                       w3_ref, s3_ref, b3_ref,
                       o_ref, *, H, W):
    # x_ref block: (Nb, H*W, Cp)  -- channel axis already padded to 128 lanes.
    Nb, HW, Cp = x_ref.shape
    Wp = w1_ref.shape[1]
    M = Nb * HW

    x_f32 = x_ref[...].reshape(M, Cp)              # f32, reused for residual
    x_bf = x_f32.astype(jnp.bfloat16)

    # --- reduction block: 1x1 conv (matmul) -> BN(folded) -> ReLU ------------
    h1 = jnp.dot(x_bf, w1_ref[...], preferred_element_type=jnp.float32)
    h1 = jnp.maximum(h1 * s1_ref[...] + b1_ref[...], 0.0)       # f32 epilogue
    h1 = h1.astype(jnp.bfloat16)                                 # (M, Wp)

    # --- conv block: 3x3 conv (stride=1, pad=1) as one im2col matmul ---------
    h1sp = h1.reshape(Nb, H, W, Wp)
    zrow = jnp.zeros((Nb, 1, W, Wp), h1sp.dtype)
    xp = jnp.concatenate([zrow, h1sp, zrow], axis=1)             # (Nb,H+2,W,Wp)
    zcol = jnp.zeros((Nb, H + 2, 1, Wp), h1sp.dtype)
    xp = jnp.concatenate([zcol, xp, zcol], axis=2)               # (Nb,H+2,W+2,Wp)
    # Tap t = dy*3 + dx occupies lanes [t*Wp, (t+1)*Wp) -- matches the
    # (9*Wp, Wp) row-stacked weight layout built in the wrapper.
    patches = jnp.concatenate(
        [xp[:, dy:dy + H, dx:dx + W, :] for dy in range(3) for dx in range(3)],
        axis=-1)                                                 # (Nb,H,W,9*Wp)
    patches = patches.reshape(M, 9 * Wp)
    h2 = jnp.dot(patches, w2_ref[...], preferred_element_type=jnp.float32)
    h2 = jnp.maximum(h2 * s2_ref[...] + b2_ref[...], 0.0)        # (M, Wp) f32

    # --- expansion block: 1x1 conv (matmul) -> BN(folded) --------------------
    h3 = jnp.dot(h2.astype(jnp.bfloat16), w3_ref[...],
                 preferred_element_type=jnp.float32)
    h3 = h3 * s3_ref[...] + b3_ref[...]                          # (M, Cp)

    # --- residual add + final ReLU (downsample is None => identity = x) ------
    out = jnp.maximum(h3 + x_f32, 0.0)
    o_ref[...] = out.reshape(Nb, HW, Cp).astype(o_ref.dtype)


# ---------------------------------------------------------------------------
# Wrapper
# ---------------------------------------------------------------------------
def bottleneck_pallas(x, params, block_n=None):
    """x: (N, H, W, Cin) NHWC float32 (== PyTorch NCHW transposed)."""
    N, H, W, Cin = x.shape
    width = params["w1"].shape[1]
    Cout = params["w3"].shape[1]
    assert Cout == Cin, "downsample=None requires inplanes == planes*expansion"

    HW = H * W
    Cp = _round_up(Cin, LANES)        # padded in/out channels (Cin == Cout)
    Wp = _round_up(width, LANES)      # padded bottleneck width

    # Pick how many images share a grid step (bigger matmul M, fewer steps),
    # keeping the live working set well under the VMEM limit.
    if block_n is None:
        per_img = HW * (Cp * 16 + 9 * Wp * 4 + Wp * 12)   # rough VMEM bytes
        block_n = max(1, min(N, (16 * 1024 * 1024) // max(per_img, 1)))
        while N % block_n:
            block_n -= 1
    assert N % block_n == 0

    # --- lane-dense, channel-padded operands (built once, outside the kernel)
    x2 = _pad_to(x.reshape(N, HW, Cin), (N, HW, Cp))                    # f32
    w1p = _pad_to(params["w1"], (Cp, Wp)).astype(jnp.bfloat16)          # (Cp,Wp)
    w2p = _pad_to(params["w2"], (9, Wp, Wp)).astype(jnp.bfloat16)
    w2p = w2p.reshape(9 * Wp, Wp)                                       # im2col W
    w3p = _pad_to(params["w3"], (Wp, Cp)).astype(jnp.bfloat16)          # (Wp,Cp)
    s1p = _pad_to(params["s1"], (1, Wp))
    b1p = _pad_to(params["b1"], (1, Wp))
    s2p = _pad_to(params["s2"], (1, Wp))
    b2p = _pad_to(params["b2"], (1, Wp))
    s3p = _pad_to(params["s3"], (1, Cp))
    b3p = _pad_to(params["b3"], (1, Cp))

    kernel = functools.partial(_bottleneck_kernel, H=H, W=W)

    def const_map(n):           # weights / scale / bias are grid-invariant
        return (0, 0)

    # Advisory cost hint for XLA's scheduler around the custom call.
    total_m = N * HW
    flops = 2 * total_m * (Cp * Wp + 9 * Wp * Wp + Wp * Cp)
    bytes_accessed = (2 * total_m * Cp * 4                   # x in + out (f32)
                      + (Cp * Wp + 9 * Wp * Wp + Wp * Cp) * 2)  # bf16 weights
    cost = pl.CostEstimate(flops=flops, transcendentals=0,
                           bytes_accessed=bytes_accessed)

    out = pl.pallas_call(
        kernel,
        out_shape=jax.ShapeDtypeStruct((N, HW, Cp), x.dtype),
        grid_spec=pltpu.PrefetchScalarGridSpec(
            num_scalar_prefetch=0,
            grid=(N // block_n,),
            in_specs=[
                pl.BlockSpec((block_n, HW, Cp), lambda n: (n, 0, 0)),
                pl.BlockSpec((Cp, Wp), const_map),
                pl.BlockSpec((1, Wp), const_map),
                pl.BlockSpec((1, Wp), const_map),
                pl.BlockSpec((9 * Wp, Wp), const_map),
                pl.BlockSpec((1, Wp), const_map),
                pl.BlockSpec((1, Wp), const_map),
                pl.BlockSpec((Wp, Cp), const_map),
                pl.BlockSpec((1, Cp), const_map),
                pl.BlockSpec((1, Cp), const_map),
            ],
            out_specs=pl.BlockSpec((block_n, HW, Cp), lambda n: (n, 0, 0)),
        ),
        compiler_params=pltpu.CompilerParams(
            dimension_semantics=("parallel",),      # shard batch over TCs (v7x)
            vmem_limit_bytes=48 * 1024 * 1024),
        cost_estimate=cost,
    )(x2, w1p, s1p, b1p, w2p, s2p, b2p, w3p, s3p, b3p)

    # Strip the channel padding and restore the NHWC spatial layout.
    return out[:, :, :Cout].reshape(N, H, W, Cout)


# ---------------------------------------------------------------------------
# Pure-JAX reference (for correctness check)
# ---------------------------------------------------------------------------
def bottleneck_ref(x, params):
    width = params["w1"].shape[1]
    h = jnp.einsum("nhwc,cd->nhwd", x, params["w1"])
    h = jnp.maximum(h * params["s1"] + params["b1"], 0.0)
    w2 = params["w2"].reshape(3, 3, width, width)      # HWIO
    h = lax.conv_general_dilated(
        h, w2, window_strides=(1, 1), padding="SAME",
        dimension_numbers=("NHWC", "HWIO", "NHWC"))
    h = jnp.maximum(h * params["s2"] + params["b2"], 0.0)
    h = jnp.einsum("nhwc,cd->nhwd", h, params["w3"])
    h = h * params["s3"] + params["b3"]
    return jnp.maximum(h + x, 0.0)


# ---------------------------------------------------------------------------
# Parameter construction (deterministic, synthetic)
# ---------------------------------------------------------------------------
def make_params(inplanes, planes, key):
    width = planes            # base_width=64, groups=1 => width = planes
    cout = planes * 4         # expansion = 4
    ks = jax.random.split(key, 9)
    eps = 1e-5

    def bn_fold(kg, kb, c):
        gamma = 1.0 + 0.1 * jax.random.normal(kg, (1, c), jnp.float32)
        beta = 0.05 * jax.random.normal(kb, (1, c), jnp.float32)
        # running_mean = 0, running_var = 1  (eval-mode BN)
        scale = gamma / jnp.sqrt(1.0 + eps)
        bias = beta
        return scale, bias

    w1 = 0.1 * jax.random.normal(ks[0], (inplanes, width), jnp.float32)
    w2 = 0.1 * jax.random.normal(ks[1], (9, width, width), jnp.float32)
    w3 = 0.1 * jax.random.normal(ks[2], (width, cout), jnp.float32)
    s1, b1 = bn_fold(ks[3], ks[4], width)
    s2, b2 = bn_fold(ks[5], ks[6], width)
    s3, b3 = bn_fold(ks[7], ks[8], cout)
    return dict(w1=w1, s1=s1, b1=b1, w2=w2, s2=s2, b2=b2, w3=w3, s3=s3, b3=b3)


if __name__ == "__main__":
    key = jax.random.PRNGKey(0)
    k_x, k_p = jax.random.split(key)

    # Bottleneck(inplanes=32, planes=8, stride=1, downsample=None)
    inplanes, planes = 32, 8
    N, H, W = 2, 8, 8
    # NHWC input (equivalent NCHW shape: (2, 32, 8, 8))
    x = jax.random.normal(k_x, (N, H, W, inplanes), jnp.float32)
    params = make_params(inplanes, planes, k_p)

    out = bottleneck_pallas(x, params)
    out = jax.block_until_ready(out)

    ref = jax.block_until_ready(bottleneck_ref(x, params))
    assert out.shape == (N, H, W, planes * 4)
    # Kernel uses bf16 MXU operands (f32 accumulation), reference is pure f32.
    np.testing.assert_allclose(np.asarray(out), np.asarray(ref),
                               rtol=5e-2, atol=5e-2)
    print("KERNEL_OK")
</pallas_src>

<mosaic_0001>
module attributes {stable_mosaic.version = 11 : i64} {
  func.func @_bottleneck_kernel(%arg0: i32, %arg1: memref<2x64x128xf32, #tpu.memory_space<vmem>>, %arg2: memref<128x128xbf16, #tpu.memory_space<vmem>>, %arg3: memref<1x128xf32, #tpu.memory_space<vmem>>, %arg4: memref<1x128xf32, #tpu.memory_space<vmem>>, %arg5: memref<1152x128xbf16, #tpu.memory_space<vmem>>, %arg6: memref<1x128xf32, #tpu.memory_space<vmem>>, %arg7: memref<1x128xf32, #tpu.memory_space<vmem>>, %arg8: memref<128x128xbf16, #tpu.memory_space<vmem>>, %arg9: memref<1x128xf32, #tpu.memory_space<vmem>>, %arg10: memref<1x128xf32, #tpu.memory_space<vmem>>, %arg11: memref<2x64x128xf32, #tpu.memory_space<vmem>>) attributes {dimension_semantics = [#tpu.dimension_semantics<parallel>], iteration_bounds = array<i64: 1>, scalar_prefetch = 0 : i64, scratch_operands = 0 : i64, tpu.core_type = #tpu.core_type<tc>, window_params = [{transform_indices = @transform_0, window_bounds = array<i64: 2, 64, 128>}, {pipeline_mode = #tpu.pipeline_mode<synchronous>, transform_indices = @transform_1, window_bounds = array<i64: 128, 128>}, {pipeline_mode = #tpu.pipeline_mode<synchronous>, transform_indices = @transform_2, window_bounds = array<i64: 1, 128>}, {pipeline_mode = #tpu.pipeline_mode<synchronous>, transform_indices = @transform_3, window_bounds = array<i64: 1, 128>}, {pipeline_mode = #tpu.pipeline_mode<synchronous>, transform_indices = @transform_4, window_bounds = array<i64: 1152, 128>}, {pipeline_mode = #tpu.pipeline_mode<synchronous>, transform_indices = @transform_5, window_bounds = array<i64: 1, 128>}, {pipeline_mode = #tpu.pipeline_mode<synchronous>, transform_indices = @transform_6, window_bounds = array<i64: 1, 128>}, {pipeline_mode = #tpu.pipeline_mode<synchronous>, transform_indices = @transform_7, window_bounds = array<i64: 128, 128>}, {pipeline_mode = #tpu.pipeline_mode<synchronous>, transform_indices = @transform_8, window_bounds = array<i64: 1, 128>}, {pipeline_mode = #tpu.pipeline_mode<synchronous>, transform_indices = @transform_9, window_bounds = array<i64: 1, 128>}, {transform_indices = @transform_10, window_bounds = array<i64: 2, 64, 128>}]} {
    %c0 = arith.constant 0 : index
    %c0_0 = arith.constant 0 : index
    %c0_1 = arith.constant 0 : index
    %0 = vector.load %arg1[%c0, %c0_0, %c0_1] : memref<2x64x128xf32, #tpu.memory_space<vmem>>, vector<2x64x128xf32>
    %1 = vector.shape_cast %0 : vector<2x64x128xf32> to vector<128x128xf32>
    %2 = arith.truncf %1 : vector<128x128xf32> to vector<128x128xbf16>
    %c0_2 = arith.constant 0 : index
    %c0_3 = arith.constant 0 : index
    %3 = vector.load %arg2[%c0_2, %c0_3] : memref<128x128xbf16, #tpu.memory_space<vmem>>, vector<128x128xbf16>
    %cst = arith.constant dense<0.000000e+00> : vector<128x128xf32>
    %4 = tpu.matmul %2, %3, %cst {dimension_numbers = #tpu.dot_dimension_numbers<[1], [0], [0], [1], [0, 0, 1, 1], [], []>} : vector<128x128xbf16>, vector<128x128xbf16>, vector<128x128xf32> -> vector<128x128xf32>
    %c0_4 = arith.constant 0 : index
    %c0_5 = arith.constant 0 : index
    %5 = vector.load %arg3[%c0_4, %c0_5] : memref<1x128xf32, #tpu.memory_space<vmem>>, vector<1x128xf32>
    %6 = vector.broadcast %5 : vector<1x128xf32> to vector<128x128xf32>
    %7 = arith.mulf %4, %6 : vector<128x128xf32>
    %c0_6 = arith.constant 0 : index
    %c0_7 = arith.constant 0 : index
    %8 = vector.load %arg4[%c0_6, %c0_7] : memref<1x128xf32, #tpu.memory_space<vmem>>, vector<1x128xf32>
    %9 = vector.broadcast %8 : vector<1x128xf32> to vector<128x128xf32>
    %10 = arith.addf %7, %9 : vector<128x128xf32>
    %cst_8 = arith.constant 0.000000e+00 : f32
    %11 = vector.broadcast %cst_8 : f32 to vector<128x128xf32>
    %12 = arith.maximumf %10, %11 : vector<128x128xf32>
    %13 = arith.truncf %12 : vector<128x128xf32> to vector<128x128xbf16>
    %14 = vector.shape_cast %13 : vector<128x128xbf16> to vector<2x8x8x128xbf16>
    %cst_9 = arith.constant 0.000000e+00 : bf16
    %15 = vector.broadcast %cst_9 : bf16 to vector<2x1x8x128xbf16>
    %16 = tpu.concatenate %15, %14, %15 in 1 : vector<2x1x8x128xbf16>, vector<2x8x8x128xbf16>, vector<2x1x8x128xbf16> -> vector<2x10x8x128xbf16>
    %cst_10 = arith.constant 0.000000e+00 : bf16
    %17 = vector.broadcast %cst_10 : bf16 to vector<2x10x1x128xbf16>
    %18 = tpu.concatenate %17, %16, %17 in 2 : vector<2x10x1x128xbf16>, vector<2x10x8x128xbf16>, vector<2x10x1x128xbf16> -> vector<2x10x10x128xbf16>
    %19 = vector.extract_strided_slice %18 {offsets = [0, 0, 0, 0], sizes = [2, 8, 8, 128], strides = [1, 1, 1, 1]} : vector<2x10x10x128xbf16> to vector<2x8x8x128xbf16>
    %20 = vector.extract_strided_slice %18 {offsets = [0, 0, 1, 0], sizes = [2, 8, 8, 128], strides = [1, 1, 1, 1]} : vector<2x10x10x128xbf16> to vector<2x8x8x128xbf16>
    %21 = vector.extract_strided_slice %18 {offsets = [0, 0, 2, 0], sizes = [2, 8, 8, 128], strides = [1, 1, 1, 1]} : vector<2x10x10x128xbf16> to vector<2x8x8x128xbf16>
    %22 = vector.extract_strided_slice %18 {offsets = [0, 1, 0, 0], sizes = [2, 8, 8, 128], strides = [1, 1, 1, 1]} : vector<2x10x10x128xbf16> to vector<2x8x8x128xbf16>
    %23 = vector.extract_strided_slice %18 {offsets = [0, 1, 1, 0], sizes = [2, 8, 8, 128], strides = [1, 1, 1, 1]} : vector<2x10x10x128xbf16> to vector<2x8x8x128xbf16>
    %24 = vector.extract_strided_slice %18 {offsets = [0, 1, 2, 0], sizes = [2, 8, 8, 128], strides = [1, 1, 1, 1]} : vector<2x10x10x128xbf16> to vector<2x8x8x128xbf16>
    %25 = vector.extract_strided_slice %18 {offsets = [0, 2, 0, 0], sizes = [2, 8, 8, 128], strides = [1, 1, 1, 1]} : vector<2x10x10x128xbf16> to vector<2x8x8x128xbf16>
    %26 = vector.extract_strided_slice %18 {offsets = [0, 2, 1, 0], sizes = [2, 8, 8, 128], strides = [1, 1, 1, 1]} : vector<2x10x10x128xbf16> to vector<2x8x8x128xbf16>
    %27 = vector.extract_strided_slice %18 {offsets = [0, 2, 2, 0], sizes = [2, 8, 8, 128], strides = [1, 1, 1, 1]} : vector<2x10x10x128xbf16> to vector<2x8x8x128xbf16>
    %28 = tpu.concatenate %19, %20, %21, %22, %23, %24, %25, %26, %27 in 3 : vector<2x8x8x128xbf16>, vector<2x8x8x128xbf16>, vector<2x8x8x128xbf16>, vector<2x8x8x128xbf16>, vector<2x8x8x128xbf16>, vector<2x8x8x128xbf16>, vector<2x8x8x128xbf16>, vector<2x8x8x128xbf16>, vector<2x8x8x128xbf16> -> vector<2x8x8x1152xbf16>
    %29 = vector.shape_cast %28 : vector<2x8x8x1152xbf16> to vector<128x1152xbf16>
    %c0_11 = arith.constant 0 : index
    %c0_12 = arith.constant 0 : index
    %30 = vector.load %arg5[%c0_11, %c0_12] : memref<1152x128xbf16, #tpu.memory_space<vmem>>, vector<1152x128xbf16>
    %cst_13 = arith.constant dense<0.000000e+00> : vector<128x128xf32>
    %31 = tpu.matmul %29, %30, %cst_13 {dimension_numbers = #tpu.dot_dimension_numbers<[1], [0], [0], [1], [0, 0, 1, 1], [], []>} : vector<128x1152xbf16>, vector<1152x128xbf16>, vector<128x128xf32> -> vector<128x128xf32>
    %c0_14 = arith.constant 0 : index
    %c0_15 = arith.constant 0 : index
    %32 = vector.load %arg6[%c0_14, %c0_15] : memref<1x128xf32, #tpu.memory_space<vmem>>, vector<1x128xf32>
    %33 = vector.broadcast %32 : vector<1x128xf32> to vector<128x128xf32>
    %34 = arith.mulf %31, %33 : vector<128x128xf32>
    %c0_16 = arith.constant 0 : index
    %c0_17 = arith.constant 0 : index
    %35 = vector.load %arg7[%c0_16, %c0_17] : memref<1x128xf32, #tpu.memory_space<vmem>>, vector<1x128xf32>
    %36 = vector.broadcast %35 : vector<1x128xf32> to vector<128x128xf32>
    %37 = arith.addf %34, %36 : vector<128x128xf32>
    %cst_18 = arith.constant 0.000000e+00 : f32
    %38 = vector.broadcast %cst_18 : f32 to vector<128x128xf32>
    %39 = arith.maximumf %37, %38 : vector<128x128xf32>
    %40 = arith.truncf %39 : vector<128x128xf32> to vector<128x128xbf16>
    %c0_19 = arith.constant 0 : index
    %c0_20 = arith.constant 0 : index
    %41 = vector.load %arg8[%c0_19, %c0_20] : memref<128x128xbf16, #tpu.memory_space<vmem>>, vector<128x128xbf16>
    %cst_21 = arith.constant dense<0.000000e+00> : vector<128x128xf32>
    %42 = tpu.matmul %40, %41, %cst_21 {dimension_numbers = #tpu.dot_dimension_numbers<[1], [0], [0], [1], [0, 0, 1, 1], [], []>} : vector<128x128xbf16>, vector<128x128xbf16>, vector<128x128xf32> -> vector<128x128xf32>
    %c0_22 = arith.constant 0 : index
    %c0_23 = arith.constant 0 : index
    %43 = vector.load %arg9[%c0_22, %c0_23] : memref<1x128xf32, #tpu.memory_space<vmem>>, vector<1x128xf32>
    %44 = vector.broadcast %43 : vector<1x128xf32> to vector<128x128xf32>
    %45 = arith.mulf %42, %44 : vector<128x128xf32>
    %c0_24 = arith.constant 0 : index
    %c0_25 = arith.constant 0 : index
    %46 = vector.load %arg10[%c0_24, %c0_25] : memref<1x128xf32, #tpu.memory_space<vmem>>, vector<1x128xf32>
    %47 = vector.broadcast %46 : vector<1x128xf32> to vector<128x128xf32>
    %48 = arith.addf %45, %47 : vector<128x128xf32>
    %49 = arith.addf %48, %1 : vector<128x128xf32>
    %cst_26 = arith.constant 0.000000e+00 : f32
    %50 = vector.broadcast %cst_26 : f32 to vector<128x128xf32>
    %51 = arith.maximumf %49, %50 : vector<128x128xf32>
    %52 = vector.shape_cast %51 : vector<128x128xf32> to vector<2x64x128xf32>
    %c0_27 = arith.constant 0 : index
    %c0_28 = arith.constant 0 : index
    %c0_29 = arith.constant 0 : index
    %53 = vector.load %arg11[%c0_27, %c0_28, %c0_29] : memref<2x64x128xf32, #tpu.memory_space<vmem>>, vector<2x64x128xf32>
    tpu.vector_store %arg11[%c0_27, %c0_28, %c0_29], %52 {strides = array<i32>} : memref<2x64x128xf32, #tpu.memory_space<vmem>>, vector<2x64x128xf32>,
    return
  }
  func.func @transform_0(%arg0: i32) -> (i32, i32, i32) {
    %c0_i32 = arith.constant 0 : i32
    %c0_i32_0 = arith.constant 0 : i32
    %c0_i32_1 = arith.constant 0 : i32
    return %arg0, %c0_i32, %c0_i32_0 : i32, i32, i32
  }
  func.func @transform_1(%arg0: i32) -> (i32, i32) {
    %c0_i32 = arith.constant 0 : i32
    %c0_i32_0 = arith.constant 0 : i32
    %c0_i32_1 = arith.constant 0 : i32
    return %c0_i32, %c0_i32_0 : i32, i32
  }
  func.func @transform_2(%arg0: i32) -> (i32, i32) {
    %c0_i32 = arith.constant 0 : i32
    %c0_i32_0 = arith.constant 0 : i32
    %c0_i32_1 = arith.constant 0 : i32
    return %c0_i32, %c0_i32_0 : i32, i32
  }
  func.func @transform_3(%arg0: i32) -> (i32, i32) {
    %c0_i32 = arith.constant 0 : i32
    %c0_i32_0 = arith.constant 0 : i32
    %c0_i32_1 = arith.constant 0 : i32
    return %c0_i32, %c0_i32_0 : i32, i32
  }
  func.func @transform_4(%arg0: i32) -> (i32, i32) {
    %c0_i32 = arith.constant 0 : i32
    %c0_i32_0 = arith.constant 0 : i32
    %c0_i32_1 = arith.constant 0 : i32
    return %c0_i32, %c0_i32_0 : i32, i32
  }
  func.func @transform_5(%arg0: i32) -> (i32, i32) {
    %c0_i32 = arith.constant 0 : i32
    %c0_i32_0 = arith.constant 0 : i32
    %c0_i32_1 = arith.constant 0 : i32
    return %c0_i32, %c0_i32_0 : i32, i32
  }
  func.func @transform_6(%arg0: i32) -> (i32, i32) {
    %c0_i32 = arith.constant 0 : i32
    %c0_i32_0 = arith.constant 0 : i32
    %c0_i32_1 = arith.constant 0 : i32
    return %c0_i32, %c0_i32_0 : i32, i32
  }
  func.func @transform_7(%arg0: i32) -> (i32, i32) {
    %c0_i32 = arith.constant 0 : i32
    %c0_i32_0 = arith.constant 0 : i32
    %c0_i32_1 = arith.constant 0 : i32
    return %c0_i32, %c0_i32_0 : i32, i32
  }
  func.func @transform_8(%arg0: i32) -> (i32, i32) {
    %c0_i32 = arith.constant 0 : i32
    %c0_i32_0 = arith.constant 0 : i32
    %c0_i32_1 = arith.constant 0 : i32
    return %c0_i32, %c0_i32_0 : i32, i32
  }
  func.func @transform_9(%arg0: i32) -> (i32, i32) {
    %c0_i32 = arith.constant 0 : i32
    %c0_i32_0 = arith.constant 0 : i32
    %c0_i32_1 = arith.constant 0 : i32
    return %c0_i32, %c0_i32_0 : i32, i32
  }
  func.func @transform_10(%arg0: i32) -> (i32, i32, i32) {
    %c0_i32 = arith.constant 0 : i32
    %c0_i32_0 = arith.constant 0 : i32
    %c0_i32_1 = arith.constant 0 : i32
    return %arg0, %c0_i32, %c0_i32_0 : i32, i32, i32
  }
}

</mosaic_0001>

<llo_original>
// kernel: tpu_custom_call.1
$region0: #{tpu_custom_call.1}
  #allocation0 [shape = 'u32[]', space=smem, size = 0x4, offset = 0x4, fixed_abs, tag = 'smem constant byte address 0x4 - core index']
  #allocation1 [shape = 'u32[144,128]{1,0:T(1,128)}', space=vmem, size = 0x12000, scoped, tag = 'internal scratch']
  %s0 = inlined_call_operand.hbm [shape: f32[2,64,128], index: 0, kind: input, shape index: {}]
  %s1 = inlined_call_operand.hbm [shape: bf16[128,128], index: 1, kind: input, shape index: {}]
  %s2 = inlined_call_operand.vmem [shape: f32[1,128], index: 2, kind: input, shape index: {}]
  %s3 = inlined_call_operand.vmem [shape: f32[1,128], index: 3, kind: input, shape index: {}]
  %s4 = inlined_call_operand.hbm [shape: bf16[1152,128], index: 4, kind: input, shape index: {}]
  %s5 = inlined_call_operand.vmem [shape: f32[1,128], index: 5, kind: input, shape index: {}]
  %s6 = inlined_call_operand.vmem [shape: f32[1,128], index: 6, kind: input, shape index: {}]
  %s7 = inlined_call_operand.hbm [shape: bf16[128,128], index: 7, kind: input, shape index: {}]
  %s8 = inlined_call_operand.vmem [shape: f32[1,128], index: 8, kind: input, shape index: {}]
  %s9 = inlined_call_operand.vmem [shape: f32[1,128], index: 9, kind: input, shape index: {}]
  %s10 = inlined_call_operand.hbm [shape: f32[2,64,128], index: 10, kind: output, shape index: {}]
  %s11 = sld [smem:[#allocation0]]
  $region66: #{tpu_custom_call.1} parent=0
    _
  %s13 = ssub.s32 1, %s11
  %s14 = scalar_select 0, %s13, %s11
  $region1: #{tpu_custom_call.1} parent=0
    #allocation2 [shape = 'u8[65536]{0}', space=vmem, size = 0x10000, scoped, tag = 'input window, operand 0, single buffered']
    #allocation3 [shape = 's32[1]{0}', space=sflag, size = 0x4, scoped, tag = 'scoped memory for tpu_custom_call.1']
    #allocation4 [shape = 's32[1]{0}', space=sflag, size = 0x4, scoped, tag = 'scoped memory for tpu_custom_call.1']
    #allocation5 [shape = 'u8[32768]{0}', space=vmem, size = 0x8000, scoped, tag = 'input window, operand 1, single buffered']
    #allocation6 [shape = 's32[1]{0}', space=sflag, size = 0x4, scoped, tag = 'scoped memory for tpu_custom_call.1']
    #allocation7 [shape = 'u8[294912]{0}', space=vmem, size = 0x48000, scoped, tag = 'input window, operand 4, single buffered']
    #allocation8 [shape = 'u8[32768]{0}', space=vmem, size = 0x8000, scoped, tag = 'input window, operand 7, single buffered']
    #allocation9 [shape = 's32[1]{0}', space=sflag, size = 0x4, scoped, tag = 'scoped memory for tpu_custom_call.1']
    #allocation10 [shape = 'u8[65536]{0}', space=vmem, size = 0x10000, scoped, tag = 'output window, operand 0, single buffered']
    %15 = vsyncpa [#allocation3], 0
    %16 = vsyncpa [#allocation6], 0
    %17 = vsyncpa [#allocation9], 0
    %18 = vsyncpa [#allocation4], 0
    // Predicated region
    $region2: #{tpu_custom_call.1} parent=1 // pred_check
      _
    $region3: #{tpu_custom_call.1} parent=1 // pred_check_branch
      %20 = sbr.rel (0) target = $region5
    $region4: #{tpu_custom_call.1} parent=1 // pred_region
      %s22 = ssub.s32 2048, 2048
      %23 = vsyncadd [#allocation3], %s22
      %s24 = sshll.u32 [#allocation2], 4
      %s25 = int_to_ptr.vmem [resolvable:$true] %s24
      %30 = dma.hbm_to_vmem [thread:$0]  %s0, 2048, %s25, [#allocation3], 128, 128, 8
    $region5: #{tpu_custom_call.1} parent=1 // pred_fallthru
      _
    // Predicated region
    $region6: #{tpu_custom_call.1} parent=1 // pred_check
      _
    $region7: #{tpu_custom_call.1} parent=1 // pred_check_branch
      %32 = sbr.rel (0) target = $region9
    $region8: #{tpu_custom_call.1} parent=1 // pred_region
      %s34 = ssub.s32 1024, 1024
      %35 = vsyncadd [#allocation6], %s34
      %s36 = sshll.u32 [#allocation5], 4
      %s37 = int_to_ptr.vmem [resolvable:$true] %s36
      %42 = dma.hbm_to_vmem [thread:$0]  %s1, 1024, %s37, [#allocation6], 64, 64, 4
    $region9: #{tpu_custom_call.1} parent=1 // pred_fallthru
      _
    // Predicated region
    $region10: #{tpu_custom_call.1} parent=1 // pred_check
      _
    $region11: #{tpu_custom_call.1} parent=1 // pred_check_branch
      %44 = sbr.rel (0) target = $region13
    $region12: #{tpu_custom_call.1} parent=1 // pred_region
      _
    $region13: #{tpu_custom_call.1} parent=1 // pred_fallthru
      _
    // Predicated region
    $region14: #{tpu_custom_call.1} parent=1 // pred_check
      _
    $region15: #{tpu_custom_call.1} parent=1 // pred_check_branch
      %46 = sbr.rel (0) target = $region17
    $region16: #{tpu_custom_call.1} parent=1 // pred_region
      _
    $region17: #{tpu_custom_call.1} parent=1 // pred_fallthru
      _
    // Predicated region
    $region18: #{tpu_custom_call.1} parent=1 // pred_check
      _
    $region19: #{tpu_custom_call.1} parent=1 // pred_check_branch
      %48 = sbr.rel (0) target = $region21
    $region20: #{tpu_custom_call.1} parent=1 // pred_region
      %s50 = ssub.s32 9216, 9216
      %51 = vsyncadd [#allocation6], %s50
      %s52 = sshll.u32 [#allocation7], 4
      %s53 = int_to_ptr.vmem [resolvable:$true] %s52
      %58 = dma.hbm_to_vmem [thread:$0]  %s4, 9216, %s53, [#allocation6], 64, 64, 4
    $region21: #{tpu_custom_call.1} parent=1 // pred_fallthru
      _
    // Predicated region
    $region22: #{tpu_custom_call.1} parent=1 // pred_check
      _
    $region23: #{tpu_custom_call.1} parent=1 // pred_check_branch
      %60 = sbr.rel (0) target = $region25
    $region24: #{tpu_custom_call.1} parent=1 // pred_region
      _
    $region25: #{tpu_custom_call.1} parent=1 // pred_fallthru
      _
    // Predicated region
    $region26: #{tpu_custom_call.1} parent=1 // pred_check
      _
    $region27: #{tpu_custom_call.1} parent=1 // pred_check_branch
      %62 = sbr.rel (0) target = $region29
    $region28: #{tpu_custom_call.1} parent=1 // pred_region
      _
    $region29: #{tpu_custom_call.1} parent=1 // pred_fallthru
      _
    // Predicated region
    $region30: #{tpu_custom_call.1} parent=1 // pred_check
      _
    $region31: #{tpu_custom_call.1} parent=1 // pred_check_branch
      %64 = sbr.rel (0) target = $region33
    $region32: #{tpu_custom_call.1} parent=1 // pred_region
      %s66 = ssub.s32 1024, 1024
      %67 = vsyncadd [#allocation9], %s66
      %s68 = sshll.u32 [#allocation8], 4
      %s69 = int_to_ptr.vmem [resolvable:$true] %s68
      %74 = dma.hbm_to_vmem [thread:$0]  %s7, 1024, %s69, [#allocation9], 64, 64, 4
    $region33: #{tpu_custom_call.1} parent=1 // pred_fallthru
      _
    // Predicated region
    $region34: #{tpu_custom_call.1} parent=1 // pred_check
      _
    $region35: #{tpu_custom_call.1} parent=1 // pred_check_branch
      %76 = sbr.rel (0) target = $region37
    $region36: #{tpu_custom_call.1} parent=1 // pred_region
      _
    $region37: #{tpu_custom_call.1} parent=1 // pred_fallthru
      _
    // Predicated region
    $region38: #{tpu_custom_call.1} parent=1 // pred_check
      _
    $region39: #{tpu_custom_call.1} parent=1 // pred_check_branch
      %78 = sbr.rel (0) target = $region41
    $region40: #{tpu_custom_call.1} parent=1 // pred_region
      _
    $region41: #{tpu_custom_call.1} parent=1 // pred_fallthru
      _
    // Predicated region
    $region42: #{tpu_custom_call.1} parent=1 // pred_check
      _
    $region43: #{tpu_custom_call.1} parent=1 // pred_check_branch
      %80 = sbr.rel (0) target = $region45
    $region44: #{tpu_custom_call.1} parent=1 // pred_region
      %81 = dma.done [#allocation3], 2048
    $region45: #{tpu_custom_call.1} parent=1 // pred_fallthru
      _
    // Predicated region
    $region46: #{tpu_custom_call.1} parent=1 // pred_check
      _
    $region47: #{tpu_custom_call.1} parent=1 // pred_check_branch
      %83 = sbr.rel (0) target = $region49
    $region48: #{tpu_custom_call.1} parent=1 // pred_region
      %84 = dma.done [#allocation6], 1024
    $region49: #{tpu_custom_call.1} parent=1 // pred_fallthru
      _
    // Predicated region
    $region50: #{tpu_custom_call.1} parent=1 // pred_check
      _
    $region51: #{tpu_custom_call.1} parent=1 // pred_check_branch
      %86 = sbr.rel (0) target = $region53
    $region52: #{tpu_custom_call.1} parent=1 // pred_region
      %87 = dma.done [#allocation6], 9216
    $region53: #{tpu_custom_call.1} parent=1 // pred_fallthru
      _
    // Predicated region
    $region54: #{tpu_custom_call.1} parent=1 // pred_check
      _
    $region55: #{tpu_custom_call.1} parent=1 // pred_check_branch
      %89 = sbr.rel (0) target = $region57
    $region56: #{tpu_custom_call.1} parent=1 // pred_region
      %90 = dma.done [#allocation9], 1024
    $region57: #{tpu_custom_call.1} parent=1 // pred_fallthru
      _
    %v92 = vld [vmem:[#allocation2] sm:$0xff]
    %v93 = vld [vmem:[#allocation2 + $0x8] sm:$0xff]
    %v94 = vld [vmem:[#allocation2 + $0x10] sm:$0xff]
    %v95 = vld [vmem:[#allocation2 + $0x18] sm:$0xff]
    %v96 = vld [vmem:[#allocation2 + $0x20] sm:$0xff]
    %v97 = vld [vmem:[#allocation2 + $0x28] sm:$0xff]
    %v98 = vld [vmem:[#allocation2 + $0x30] sm:$0xff]
    %v99 = vld [vmem:[#allocation2 + $0x38] sm:$0xff]
    %v100 = vld [vmem:[#allocation2 + $0x40] sm:$0xff]
    %v101 = vld [vmem:[#allocation2 + $0x48] sm:$0xff]
    %v102 = vld [vmem:[#allocation2 + $0x50] sm:$0xff]
    %v103 = vld [vmem:[#allocation2 + $0x58] sm:$0xff]
    %v104 = vld [vmem:[#allocation2 + $0x60] sm:$0xff]
    %v105 = vld [vmem:[#allocation2 + $0x68] sm:$0xff]
    %v106 = vld [vmem:[#allocation2 + $0x70] sm:$0xff]
    %v107 = vld [vmem:[#allocation2 + $0x78] sm:$0xff]
    %v108 = vpack.c.bf16 %v93, %v92
    %v109 = vpack.c.bf16 %v95, %v94
    %v110 = vpack.c.bf16 %v97, %v96
    %v111 = vpack.c.bf16 %v99, %v98
    %v112 = vpack.c.bf16 %v101, %v100
    %v113 = vpack.c.bf16 %v103, %v102
    %v114 = vpack.c.bf16 %v105, %v104
    %v115 = vpack.c.bf16 %v107, %v106
    %v116 = vld [vmem:[#allocation5] sm:$0xf]
    %v117 = vld [vmem:[#allocation5 + $0x4] sm:$0xf]
    %v118 = vld [vmem:[#allocation5 + $0x8] sm:$0xf]
    %v119 = vld [vmem:[#allocation5 + $0xc] sm:$0xf]
    %v120 = vld [vmem:[#allocation5 + $0x10] sm:$0xf]
    %v121 = vld [vmem:[#allocation5 + $0x14] sm:$0xf]
    %v122 = vld [vmem:[#allocation5 + $0x18] sm:$0xf]
    %v123 = vld [vmem:[#allocation5 + $0x1c] sm:$0xf]
    %v124 = vld [vmem:[#allocation5 + $0x20] sm:$0xf]
    %v125 = vld [vmem:[#allocation5 + $0x24] sm:$0xf]
    %v126 = vld [vmem:[#allocation5 + $0x28] sm:$0xf]
    %v127 = vld [vmem:[#allocation5 + $0x2c] sm:$0xf]
    %v128 = vld [vmem:[#allocation5 + $0x30] sm:$0xf]
    %v129 = vld [vmem:[#allocation5 + $0x34] sm:$0xf]
    %v130 = vld [vmem:[#allocation5 + $0x38] sm:$0xf]
    %v131 = vld [vmem:[#allocation5 + $0x3c] sm:$0xf]
    %v148 = vunpack.c.l.b16 %v116
    %v149 = vunpack.c.l.b16 %v117
    %v150 = vunpack.c.l.b16 %v118
    %v151 = vunpack.c.l.b16 %v119
    %v152 = vunpack.c.l.b16 %v120
    %v153 = vunpack.c.l.b16 %v121
    %v154 = vunpack.c.l.b16 %v122
    %v155 = vunpack.c.l.b16 %v123
    %v156 = vunpack.c.l.b16 %v124
    %v157 = vunpack.c.l.b16 %v125
    %v158 = vunpack.c.l.b16 %v126
    %v159 = vunpack.c.l.b16 %v127
    %v160 = vunpack.c.l.b16 %v128
    %v161 = vunpack.c.l.b16 %v129
    %v162 = vunpack.c.l.b16 %v130
    %v163 = vunpack.c.l.b16 %v131
    %v164 = vpack.c.b16 %v149, %v148
    %v165 = vpack.c.b16 %v151, %v150
    %v166 = vpack.c.b16 %v153, %v152
    %v167 = vpack.c.b16 %v155, %v154
    %v168 = vpack.c.b16 %v157, %v156
    %v169 = vpack.c.b16 %v159, %v158
    %v170 = vpack.c.b16 %v161, %v160
    %v171 = vpack.c.b16 %v163, %v162
    %180 = vmatprep.subr.bf16.mxu0 0
    %181 = vmatpush1.bf16.msra.mxu0 %v164
    %182 = vmatprep.subr.bf16.mxu0 0
    %183 = vmatpush1.bf16.msra.mxu0 %v165
    %184 = vmatprep.subr.bf16.mxu0 0
    %185 = vmatpush1.bf16.msra.mxu0 %v166
    %186 = vmatprep.subr.bf16.mxu0 0
    %187 = vmatpush1.bf16.msra.mxu0 %v167
    %188 = vmatprep.subr.bf16.mxu0 0
    %189 = vmatpush1.bf16.msra.mxu0 %v168
    %190 = vmatprep.subr.bf16.mxu0 0
    %191 = vmatpush1.bf16.msra.mxu0 %v169
    %192 = vmatprep.subr.bf16.mxu0 0
    %193 = vmatpush1.bf16.msra.mxu0 %v170
    %194 = vmatprep.subr.bf16.mxu0 0
    %195 = vmatpush1.bf16.msra.mxu0 %v171
    %196 = vmatprep.subr.bf16.mxu0 0
    %197 = vmatpush1.bf16.msra.mxu0 0
    %198 = vmatprep.subr.bf16.mxu0 0
    %199 = vmatpush1.bf16.msra.mxu0 0
    %200 = vmatprep.subr.bf16.mxu0 0
    %201 = vmatpush1.bf16.msra.mxu0 0
    %202 = vmatprep.subr.bf16.mxu0 0
    %203 = vmatpush1.bf16.msra.mxu0 0
    %204 = vmatprep.subr.bf16.mxu0 0
    %205 = vmatpush1.bf16.msra.mxu0 0
    %206 = vmatprep.subr.bf16.mxu0 0
    %207 = vmatpush1.bf16.msra.mxu0 0
    %208 = vmatprep.subr.bf16.mxu0 0
    %209 = vmatpush1.bf16.msra.mxu0 0
    %210 = vmatprep.subr.bf16.mxu0 0
    %211 = vmatpush1.bf16.msra.mxu0 0
    %212 = vmatprep.mubr.bf16.mxu0 0
    %213 = vmatmul.mubr.bf16.gmra.mrb[0].mxu0 %v108
    %v214 = vpop.f32.mrb[0].mxu0
    %v215 = vadd.f32 0.0, %v214
    %v216 = vpop.f32.mrb[0].mxu0
    %v217 = vpop.f32.mrb[0].mxu0
    %v218 = vadd.f32 0.0, %v217
    %v219 = vpop.f32.mrb[0].mxu0
    %220 = vmatprep.mubr.bf16.mxu0 0
    %221 = vmatmul.mubr.bf16.gmra.mrb[0].mxu0 %v109
    %v222 = vpop.f32.mrb[0].mxu0
    %v223 = vadd.f32 0.0, %v222
    %v224 = vpop.f32.mrb[0].mxu0
    %v225 = vpop.f32.mrb[0].mxu0
    %v226 = vadd.f32 0.0, %v225
    %v227 = vpop.f32.mrb[0].mxu0
    %228 = vmatprep.mubr.bf16.mxu0 0
    %229 = vmatmul.mubr.bf16.gmra.mrb[0].mxu0 %v110
    %v230 = vpop.f32.mrb[0].mxu0
    %v231 = vadd.f32 0.0, %v230
    %v232 = vpop.f32.mrb[0].mxu0
    %v233 = vpop.f32.mrb[0].mxu0
    %v234 = vadd.f32 0.0, %v233
    %v235 = vpop.f32.mrb[0].mxu0
    %236 = vmatprep.mubr.bf16.mxu0 0
    %237 = vmatmul.mubr.bf16.gmra.mrb[0].mxu0 %v111
    %v238 = vpop.f32.mrb[0].mxu0
    %v239 = vadd.f32 0.0, %v238
    %v240 = vpop.f32.mrb[0].mxu0
    %v241 = vpop.f32.mrb[0].mxu0
    %v242 = vadd.f32 0.0, %v241
    %v243 = vpop.f32.mrb[0].mxu0
    %244 = vmatprep.mubr.bf16.mxu0 0
    %245 = vmatmul.mubr.bf16.gmra.mrb[0].mxu0 %v112
    %v246 = vpop.f32.mrb[0].mxu0
    %v247 = vadd.f32 0.0, %v246
    %v248 = vpop.f32.mrb[0].mxu0
    %v249 = vpop.f32.mrb[0].mxu0
    %v250 = vadd.f32 0.0, %v249
    %v251 = vpop.f32.mrb[0].mxu0
    %252 = vmatprep.mubr.bf16.mxu0 0
    %253 = vmatmul.mubr.bf16.gmra.mrb[0].mxu0 %v113
    %v254 = vpop.f32.mrb[0].mxu0
    %v255 = vadd.f32 0.0, %v254
    %v256 = vpop.f32.mrb[0].mxu0
    %v257 = vpop.f32.mrb[0].mxu0
    %v258 = vadd.f32 0.0, %v257
    %v259 = vpop.f32.mrb[0].mxu0
    %260 = vmatprep.mubr.bf16.mxu0 0
    %261 = vmatmul.mubr.bf16.gmra.mrb[0].mxu0 %v114
    %v262 = vpop.f32.mrb[0].mxu0
    %v263 = vadd.f32 0.0, %v262
    %v264 = vpop.f32.mrb[0].mxu0
    %v265 = vpop.f32.mrb[0].mxu0
    %v266 = vadd.f32 0.0, %v265
    %v267 = vpop.f32.mrb[0].mxu0
    %268 = vmatprep.mubr.bf16.mxu0 0
    %269 = vmatmul.mubr.bf16.gmra.mrb[0].mxu0 %v115
    %v270 = vpop.f32.mrb[0].mxu0
    %v271 = vadd.f32 0.0, %v270
    %v272 = vpop.f32.mrb[0].mxu0
    %v273 = vpop.f32.mrb[0].mxu0
    %v274 = vadd.f32 0.0, %v273
    %v275 = vpop.f32.mrb[0].mxu0
    %276 = vdwg.mxu0
    %v277 = vld [vmem:[%s2] sm:$0x1]
    %v279 = vlaneseq
    %v280 = vshrl.u32 %v279, 7
    %v281 = vsub.s32 0, %v280
    %v282 = vrot.slane %v277, %v281
    %v284 = vmul.f32 %v215, %v282
    %v285 = vmul.f32 %v218, %v282
    %v286 = vmul.f32 %v223, %v282
    %v287 = vmul.f32 %v226, %v282
    %v288 = vmul.f32 %v231, %v282
    %v289 = vmul.f32 %v234, %v282
    %v290 = vmul.f32 %v239, %v282
    %v291 = vmul.f32 %v242, %v282
    %v292 = vmul.f32 %v247, %v282
    %v293 = vmul.f32 %v250, %v282
    %v294 = vmul.f32 %v255, %v282
    %v295 = vmul.f32 %v258, %v282
    %v296 = vmul.f32 %v263, %v282
    %v297 = vmul.f32 %v266, %v282
    %v298 = vmul.f32 %v271, %v282
    %v299 = vmul.f32 %v274, %v282
    %v300 = vld [vmem:[%s3] sm:$0x1]
    %v302 = vlaneseq
    %v303 = vshrl.u32 %v302, 7
    %v304 = vsub.s32 0, %v303
    %v305 = vrot.slane %v300, %v304
    %v307 = vadd.f32 %v284, %v305
    %v308 = vadd.f32 %v285, %v305
    %v309 = vadd.f32 %v286, %v305
    %v310 = vadd.f32 %v287, %v305
    %v311 = vadd.f32 %v288, %v305
    %v312 = vadd.f32 %v289, %v305
    %v313 = vadd.f32 %v290, %v305
    %v314 = vadd.f32 %v291, %v305
    %v315 = vadd.f32 %v292, %v305
    %v316 = vadd.f32 %v293, %v305
    %v317 = vadd.f32 %v294, %v305
    %v318 = vadd.f32 %v295, %v305
    %v319 = vadd.f32 %v296, %v305
    %v320 = vadd.f32 %v297, %v305
    %v321 = vadd.f32 %v298, %v305
    %v322 = vadd.f32 %v299, %v305
    %v323 = vmax.f32 %v307, 0.0
    %v324 = vmax.f32 %v308, 0.0
    %v325 = vmax.f32 %v309, 0.0
    %v326 = vmax.f32 %v310, 0.0
    %v327 = vmax.f32 %v311, 0.0
    %v328 = vmax.f32 %v312, 0.0
    %v329 = vmax.f32 %v313, 0.0
    %v330 = vmax.f32 %v314, 0.0
    %v331 = vmax.f32 %v315, 0.0
    %v332 = vmax.f32 %v316, 0.0
    %v333 = vmax.f32 %v317, 0.0
    %v334 = vmax.f32 %v318, 0.0
    %v335 = vmax.f32 %v319, 0.0
    %v336 = vmax.f32 %v320, 0.0
    %v337 = vmax.f32 %v321, 0.0
    %v338 = vmax.f32 %v322, 0.0
    %v339 = vpack.c.bf16 %v324, %v323
    %v340 = vpack.c.bf16 %v326, %v325
    %v341 = vpack.c.bf16 %v328, %v327
    %v342 = vpack.c.bf16 %v330, %v329
    %v343 = vpack.c.bf16 %v332, %v331
    %v344 = vpack.c.bf16 %v334, %v333
    %v345 = vpack.c.bf16 %v336, %v335
    %v346 = vpack.c.bf16 %v338, %v337
    %v355 = vunpack.c.l.b16 %v339
    %v356 = vunpack.c.h.b16 %v339
    %v357 = vunpack.c.l.b16 %v340
    %v358 = vunpack.c.h.b16 %v340
    %v359 = vunpack.c.l.b16 %v341
    %v360 = vunpack.c.h.b16 %v341
    %v361 = vunpack.c.l.b16 %v342
    %v362 = vunpack.c.h.b16 %v342
    %v363 = vunpack.c.l.b16 %v343
    %v364 = vunpack.c.h.b16 %v343
    %v365 = vunpack.c.l.b16 %v344
    %v366 = vunpack.c.h.b16 %v344
    %v367 = vunpack.c.l.b16 %v345
    %v368 = vunpack.c.h.b16 %v345
    %v369 = vunpack.c.l.b16 %v346
    %v370 = vunpack.c.h.b16 %v346
    %v371 = vpack.c.b16 %v355, %v355
    %v372 = vpack.c.b16 %v356, %v356
    %v373 = vpack.c.b16 %v357, %v357
    %v374 = vpack.c.b16 %v358, %v358
    %v375 = vpack.c.b16 %v359, %v359
    %v376 = vpack.c.b16 %v360, %v360
    %v377 = vpack.c.b16 %v361, %v361
    %v378 = vpack.c.b16 %v362, %v362
    %v379 = vpack.c.b16 %v363, %v363
    %v380 = vpack.c.b16 %v364, %v364
    %v381 = vpack.c.b16 %v365, %v365
    %v382 = vpack.c.b16 %v366, %v366
    %v383 = vpack.c.b16 %v367, %v367
    %v384 = vpack.c.b16 %v368, %v368
    %v385 = vpack.c.b16 %v369, %v369
    %v386 = vpack.c.b16 %v370, %v370
    %v388 = vshrl.u32 0, 16
    %v390 = vrot.slane %v388, 7
    %v391 = vshll.u32 0, 16
    %v393 = vor.u32 %v390, %v391
    %v395 = vshrl.u32 %v371, 16
    %v397 = vrot.slane %v395, 7
    %v398 = vshll.u32 %v371, 16
    %v400 = vor.u32 %v397, %v398
    %v402 = vshrl.u32 %v372, 16
    %v404 = vrot.slane %v402, 7
    %v405 = vshll.u32 %v372, 16
    %v407 = vor.u32 %v404, %v405
    %v409 = vshrl.u32 %v373, 16
    %v411 = vrot.slane %v409, 7
    %v412 = vshll.u32 %v373, 16
    %v414 = vor.u32 %v411, %v412
    %v416 = vshrl.u32 %v374, 16
    %v418 = vrot.slane %v416, 7
    %v419 = vshll.u32 %v374, 16
    %v421 = vor.u32 %v418, %v419
    %v423 = vshrl.u32 %v375, 16
    %v425 = vrot.slane %v423, 7
    %v426 = vshll.u32 %v375, 16
    %v428 = vor.u32 %v425, %v426
    %v430 = vshrl.u32 %v376, 16
    %v432 = vrot.slane %v430, 7
    %v433 = vshll.u32 %v376, 16
    %v435 = vor.u32 %v432, %v433
    %v437 = vshrl.u32 %v377, 16
    %v439 = vrot.slane %v437, 7
    %v440 = vshll.u32 %v377, 16
    %v442 = vor.u32 %v439, %v440
    %v444 = vshrl.u32 %v378, 16
    %v446 = vrot.slane %v444, 7
    %v447 = vshll.u32 %v378, 16
    %v449 = vor.u32 %v446, %v447
    %v451 = vshrl.u32 %v379, 16
    %v453 = vrot.slane %v451, 7
    %v454 = vshll.u32 %v379, 16
    %v456 = vor.u32 %v453, %v454
    %v458 = vshrl.u32 %v380, 16
    %v460 = vrot.slane %v458, 7
    %v461 = vshll.u32 %v380, 16
    %v463 = vor.u32 %v460, %v461
    %v465 = vshrl.u32 %v381, 16
    %v467 = vrot.slane %v465, 7
    %v468 = vshll.u32 %v381, 16
    %v470 = vor.u32 %v467, %v468
    %v472 = vshrl.u32 %v382, 16
    %v474 = vrot.slane %v472, 7
    %v475 = vshll.u32 %v382, 16
    %v477 = vor.u32 %v474, %v475
    %v479 = vshrl.u32 %v383, 16
    %v481 = vrot.slane %v479, 7
    %v482 = vshll.u32 %v383, 16
    %v484 = vor.u32 %v481, %v482
    %v486 = vshrl.u32 %v384, 16
    %v488 = vrot.slane %v486, 7
    %v489 = vshll.u32 %v384, 16
    %v491 = vor.u32 %v488, %v489
    %v493 = vshrl.u32 %v385, 16
    %v495 = vrot.slane %v493, 7
    %v496 = vshll.u32 %v385, 16
    %v498 = vor.u32 %v495, %v496
    %v500 = vshrl.u32 %v386, 16
    %v502 = vrot.slane %v500, 7
    %v503 = vshll.u32 %v386, 16
    %v505 = vor.u32 %v502, %v503
    %vm523 = vcmask 1040384
    %vm524 = vsmask.f32 256
    %vm525 = vmand %vm523, %vm524
    %v526 = vsel %vm525, 0, %v393
    %v527 = vsel %vm525, 0, %v400
    %v528 = vsel %vm525, 0, %v407
    %v529 = vsel %vm525, 0, %v414
    %v530 = vsel %vm525, 0, %v421
    %v531 = vsel %vm525, 0, %v428
    %v532 = vsel %vm525, 0, %v435
    %v533 = vsel %vm525, 0, %v442
    %v534 = vsel %vm525, 0, %v449
    %v535 = vsel %vm525, 0, %v456
    %v536 = vsel %vm525, 0, %v463
    %v537 = vsel %vm525, 0, %v470
    %v538 = vsel %vm525, 0, %v477
    %v539 = vsel %vm525, 0, %v484
    %v540 = vsel %vm525, 0, %v491
    %v541 = vsel %vm525, 0, %v498
    %v542 = vsel %vm525, 0, %v505
    %vm543 = vcmask 1044480
    %vm544 = vsmask.f32 4352
    %vm545 = vmand %vm543, %vm544
    %v546 = vsel %vm545, %v526, 0
    %v547 = vsel %vm545, %v527, 0
    %v548 = vsel %vm545, %v528, 0
    %v549 = vsel %vm545, %v529, 0
    %v550 = vsel %vm545, %v530, 0
    %v551 = vsel %vm545, %v531, 0
    %v552 = vsel %vm545, %v532, 0
    %v553 = vsel %vm545, %v533, 0
    %v554 = vsel %vm545, %v534, 0
    %v555 = vsel %vm545, %v535, 0
    %v556 = vsel %vm545, %v536, 0
    %v557 = vsel %vm545, %v537, 0
    %v558 = vsel %vm545, %v538, 0
    %v559 = vsel %vm545, %v539, 0
    %v560 = vsel %vm545, %v540, 0
    %v561 = vsel %vm545, %v541, 0
    %v562 = vsel %vm545, %v542, 0
    %v564 = vshrl.u32 %v546, 16
    %v566 = vshll.u32 %v546, 16
    %v568 = vrot.slane %v566, 1
    %v569 = vor.u32 %v564, %v568
    %v571 = vshrl.u32 %v547, 16
    %v573 = vshll.u32 %v547, 16
    %v575 = vrot.slane %v573, 1
    %v576 = vor.u32 %v571, %v575
    %v578 = vshrl.u32 %v548, 16
    %v580 = vshll.u32 %v548, 16
    %v582 = vrot.slane %v580, 1
    %v583 = vor.u32 %v578, %v582
    %v585 = vshrl.u32 %v549, 16
    %v587 = vshll.u32 %v549, 16
    %v589 = vrot.slane %v587, 1
    %v590 = vor.u32 %v585, %v589
    %v592 = vshrl.u32 %v550, 16
    %v594 = vshll.u32 %v550, 16
    %v596 = vrot.slane %v594, 1
    %v597 = vor.u32 %v592, %v596
    %v599 = vshrl.u32 %v551, 16
    %v601 = vshll.u32 %v551, 16
    %v603 = vrot.slane %v601, 1
    %v604 = vor.u32 %v599, %v603
    %v606 = vshrl.u32 %v552, 16
    %v608 = vshll.u32 %v552, 16
    %v610 = vrot.slane %v608, 1
    %v611 = vor.u32 %v606, %v610
    %v613 = vshrl.u32 %v553, 16
    %v615 = vshll.u32 %v553, 16
    %v617 = vrot.slane %v615, 1
    %v618 = vor.u32 %v613, %v617
    %v620 = vshrl.u32 %v555, 16
    %v622 = vshll.u32 %v555, 16
    %v624 = vrot.slane %v622, 1
    %v625 = vor.u32 %v620, %v624
    %v627 = vshrl.u32 %v556, 16
    %v629 = vshll.u32 %v556, 16
    %v631 = vrot.slane %v629, 1
    %v632 = vor.u32 %v627, %v631
    %v634 = vshrl.u32 %v557, 16
    %v636 = vshll.u32 %v557, 16
    %v638 = vrot.slane %v636, 1
    %v639 = vor.u32 %v634, %v638
    %v641 = vshrl.u32 %v558, 16
    %v643 = vshll.u32 %v558, 16
    %v645 = vrot.slane %v643, 1
    %v646 = vor.u32 %v641, %v645
    %v648 = vshrl.u32 %v559, 16
    %v650 = vshll.u32 %v559, 16
    %v652 = vrot.slane %v650, 1
    %v653 = vor.u32 %v648, %v652
    %v655 = vshrl.u32 %v560, 16
    %v657 = vshll.u32 %v560, 16
    %v659 = vrot.slane %v657, 1
    %v660 = vor.u32 %v655, %v659
    %v662 = vshrl.u32 %v561, 16
    %v664 = vshll.u32 %v561, 16
    %v666 = vrot.slane %v664, 1
    %v667 = vor.u32 %v662, %v666
    %v683 = vrot.slane %v546, 1
    %v684 = vrot.slane %v547, 1
    %v685 = vrot.slane %v548, 1
    %v686 = vrot.slane %v549, 1
    %v687 = vrot.slane %v550, 1
    %v688 = vrot.slane %v551, 1
    %v689 = vrot.slane %v552, 1
    %v690 = vrot.slane %v553, 1
    %v691 = vrot.slane %v555, 1
    %v692 = vrot.slane %v556, 1
    %v693 = vrot.slane %v557, 1
    %v694 = vrot.slane %v558, 1
    %v695 = vrot.slane %v559, 1
    %v696 = vrot.slane %v560, 1
    %v697 = vrot.slane %v561, 1
    %v699 = vshrl.u32 %v554, 16
    %v701 = vshll.u32 %v554, 16
    %v703 = vrot.slane %v701, 1
    %v704 = vor.u32 %v699, %v703
    %v706 = vshrl.u32 %v562, 16
    %v708 = vshll.u32 %v562, 16
    %v710 = vrot.slane %v708, 1
    %v711 = vor.u32 %v706, %v710
    %v714 = vrot.slane %v554, 1
    %v715 = vrot.slane %v562, 1
    %v716 = vunpack.c.l.b16 %v546
    %v717 = vunpack.c.l.b16 %v569
    %v718 = vunpack.c.l.b16 %v683
    %v719 = vunpack.c.l.b16 %v547
    %v720 = vunpack.c.l.b16 %v576
    %v721 = vunpack.c.l.b16 %v684
    %v722 = vunpack.c.l.b16 %v548
    %v723 = vunpack.c.l.b16 %v583
    %v724 = vunpack.c.l.b16 %v685
    %v725 = vunpack.c.l.b16 %v549
    %v726 = vunpack.c.l.b16 %v590
    %v727 = vunpack.c.l.b16 %v686
    %v728 = vunpack.c.l.b16 %v550
    %v729 = vunpack.c.l.b16 %v597
    %v730 = vunpack.c.l.b16 %v687
    %v731 = vunpack.c.l.b16 %v551
    %v732 = vunpack.c.l.b16 %v604
    %v733 = vunpack.c.l.b16 %v688
    %v734 = vunpack.c.l.b16 %v552
    %v735 = vunpack.c.l.b16 %v611
    %v736 = vunpack.c.l.b16 %v689
    %v737 = vunpack.c.l.b16 %v553
    %v738 = vunpack.c.l.b16 %v618
    %v739 = vunpack.c.l.b16 %v690
    %v740 = vunpack.c.l.b16 %v554
    %v741 = vunpack.c.l.b16 %v704
    %v742 = vunpack.c.l.b16 %v714
    %v743 = vunpack.c.l.b16 %v555
    %v744 = vunpack.c.l.b16 %v625
    %v745 = vunpack.c.l.b16 %v691
    %v746 = vunpack.c.l.b16 %v556
    %v747 = vunpack.c.l.b16 %v632
    %v748 = vunpack.c.l.b16 %v692
    %v749 = vunpack.c.l.b16 %v557
    %v750 = vunpack.c.l.b16 %v639
    %v751 = vunpack.c.l.b16 %v693
    %v752 = vunpack.c.l.b16 %v558
    %v753 = vunpack.c.l.b16 %v646
    %v754 = vunpack.c.l.b16 %v694
    %v755 = vunpack.c.l.b16 %v559
    %v756 = vunpack.c.l.b16 %v653
    %v757 = vunpack.c.l.b16 %v695
    %v758 = vunpack.c.l.b16 %v560
    %v759 = vunpack.c.l.b16 %v660
    %v760 = vunpack.c.l.b16 %v696
    %v761 = vunpack.c.l.b16 %v561
    %v762 = vunpack.c.l.b16 %v667
    %v763 = vunpack.c.l.b16 %v697
    %v764 = vunpack.c.l.b16 %v562
    %v765 = vunpack.c.l.b16 %v711
    %v766 = vunpack.c.l.b16 %v715
    %v767 = vld [vmem:[#allocation7] sm:$0xf]
    %v768 = vld [vmem:[#allocation7 + $0x4] sm:$0xf]
    %v769 = vld [vmem:[#allocation7 + $0x8] sm:$0xf]
    %v770 = vld [vmem:[#allocation7 + $0xc] sm:$0xf]
    %v771 = vld [vmem:[#allocation7 + $0x10] sm:$0xf]
    %v772 = vld [vmem:[#allocation7 + $0x14] sm:$0xf]
    %v773 = vld [vmem:[#allocation7 + $0x18] sm:$0xf]
    %v774 = vld [vmem:[#allocation7 + $0x1c] sm:$0xf]
    %v775 = vld [vmem:[#allocation7 + $0x20] sm:$0xf]
    %v776 = vld [vmem:[#allocation7 + $0x24] sm:$0xf]
    %v777 = vld [vmem:[#allocation7 + $0x28] sm:$0xf]
    %v778 = vld [vmem:[#allocation7 + $0x2c] sm:$0xf]
    %v779 = vld [vmem:[#allocation7 + $0x30] sm:$0xf]
    %v780 = vld [vmem:[#allocation7 + $0x34] sm:$0xf]
    %v781 = vld [vmem:[#allocation7 + $0x38] sm:$0xf]
    %v782 = vld [vmem:[#allocation7 + $0x3c] sm:$0xf]
    %v783 = vld [vmem:[#allocation7 + $0x40] sm:$0xf]
    %v784 = vld [vmem:[#allocation7 + $0x44] sm:$0xf]
    %v785 = vld [vmem:[#allocation7 + $0x48] sm:$0xf]
    %v786 = vld [vmem:[#allocation7 + $0x4c] sm:$0xf]
    %v787 = vld [vmem:[#allocation7 + $0x50] sm:$0xf]
    %v788 = vld [vmem:[#allocation7 + $0x54] sm:$0xf]
    %v789 = vld [vmem:[#allocation7 + $0x58] sm:$0xf]
    %v790 = vld [vmem:[#allocation7 + $0x5c] sm:$0xf]
    %v791 = vld [vmem:[#allocation7 + $0x60] sm:$0xf]
    %v792 = vld [vmem:[#allocation7 + $0x64] sm:$0xf]
    %v793 = vld [vmem:[#allocation7 + $0x68] sm:$0xf]
    %v794 = vld [vmem:[#allocation7 + $0x6c] sm:$0xf]
    %v795 = vld [vmem:[#allocation7 + $0x70] sm:$0xf]
    %v796 = vld [vmem:[#allocation7 + $0x74] sm:$0xf]
    %v797 = vld [vmem:[#allocation7 + $0x78] sm:$0xf]
    %v798 = vld [vmem:[#allocation7 + $0x7c] sm:$0xf]
    %v799 = vld [vmem:[#allocation7 + $0x80] sm:$0xf]
    %v800 = vld [vmem:[#allocation7 + $0x84] sm:$0xf]
    %v801 = vld [vmem:[#allocation7 + $0x88] sm:$0xf]
    %v802 = vld [vmem:[#allocation7 + $0x8c] sm:$0xf]
    %v803 = vld [vmem:[#allocation7 + $0x90] sm:$0xf]
    %v804 = vld [vmem:[#allocation7 + $0x94] sm:$0xf]
    %v805 = vld [vmem:[#allocation7 + $0x98] sm:$0xf]
    %v806 = vld [vmem:[#allocation7 + $0x9c] sm:$0xf]
    %v807 = vld [vmem:[#allocation7 + $0xa0] sm:$0xf]
    %v808 = vld [vmem:[#allocation7 + $0xa4] sm:$0xf]
    %v809 = vld [vmem:[#allocation7 + $0xa8] sm:$0xf]
    %v810 = vld [vmem:[#allocation7 + $0xac] sm:$0xf]
    %v811 = vld [vmem:[#allocation7 + $0xb0] sm:$0xf]
    %v812 = vld [vmem:[#allocation7 + $0xb4] sm:$0xf]
    %v813 = vld [vmem:[#allocation7 + $0xb8] sm:$0xf]
    %v814 = vld [vmem:[#allocation7 + $0xbc] sm:$0xf]
    %v815 = vld [vmem:[#allocation7 + $0xc0] sm:$0xf]
    %v816 = vld [vmem:[#allocation7 + $0xc4] sm:$0xf]
    %v817 = vld [vmem:[#allocation7 + $0xc8] sm:$0xf]
    %v818 = vld [vmem:[#allocation7 + $0xcc] sm:$0xf]
    %v819 = vld [vmem:[#allocation7 + $0xd0] sm:$0xf]
    %v820 = vld [vmem:[#allocation7 + $0xd4] sm:$0xf]
    %v821 = vld [vmem:[#allocation7 + $0xd8] sm:$0xf]
    %v822 = vld [vmem:[#allocation7 + $0xdc] sm:$0xf]
    %v823 = vld [vmem:[#allocation7 + $0xe0] sm:$0xf]
    %v824 = vld [vmem:[#allocation7 + $0xe4] sm:$0xf]
    %v825 = vld [vmem:[#allocation7 + $0xe8] sm:$0xf]
    %v826 = vld [vmem:[#allocation7 + $0xec] sm:$0xf]
    %v827 = vld [vmem:[#allocation7 + $0xf0] sm:$0xf]
    %v828 = vld [vmem:[#allocation7 + $0xf4] sm:$0xf]
    %v829 = vld [vmem:[#allocation7 + $0xf8] sm:$0xf]
    %v830 = vld [vmem:[#allocation7 + $0xfc] sm:$0xf]
    %v831 = vld [vmem:[#allocation7 + $0x100] sm:$0xf]
    %v832 = vld [vmem:[#allocation7 + $0x104] sm:$0xf]
    %v833 = vld [vmem:[#allocation7 + $0x108] sm:$0xf]
    %v834 = vld [vmem:[#allocation7 + $0x10c] sm:$0xf]
    %v835 = vld [vmem:[#allocation7 + $0x110] sm:$0xf]
    %v836 = vld [vmem:[#allocation7 + $0x114] sm:$0xf]
    %v837 = vld [vmem:[#allocation7 + $0x118] sm:$0xf]
    %v838 = vld [vmem:[#allocation7 + $0x11c] sm:$0xf]
    %v839 = vld [vmem:[#allocation7 + $0x120] sm:$0xf]
    %v840 = vld [vmem:[#allocation7 + $0x124] sm:$0xf]
    %v841 = vld [vmem:[#allocation7 + $0x128] sm:$0xf]
    %v842 = vld [vmem:[#allocation7 + $0x12c] sm:$0xf]
    %v843 = vld [vmem:[#allocation7 + $0x130] sm:$0xf]
    %v844 = vld [vmem:[#allocation7 + $0x134] sm:$0xf]
    %v845 = vld [vmem:[#allocation7 + $0x138] sm:$0xf]
    %v846 = vld [vmem:[#allocation7 + $0x13c] sm:$0xf]
    %v847 = vld [vmem:[#allocation7 + $0x140] sm:$0xf]
    %v848 = vld [vmem:[#allocation7 + $0x144] sm:$0xf]
    %v849 = vld [vmem:[#allocation7 + $0x148] sm:$0xf]
    %v850 = vld [vmem:[#allocation7 + $0x14c] sm:$0xf]
    %v851 = vld [vmem:[#allocation7 + $0x150] sm:$0xf]
    %v852 = vld [vmem:[#allocation7 + $0x154] sm:$0xf]
    %v853 = vld [vmem:[#allocation7 + $0x158] sm:$0xf]
    %v854 = vld [vmem:[#allocation7 + $0x15c] sm:$0xf]
    %v855 = vld [vmem:[#allocation7 + $0x160] sm:$0xf]
    %v856 = vld [vmem:[#allocation7 + $0x164] sm:$0xf]
    %v857 = vld [vmem:[#allocation7 + $0x168] sm:$0xf]
    %v858 = vld [vmem:[#allocation7 + $0x16c] sm:$0xf]
    %v859 = vld [vmem:[#allocation7 + $0x170] sm:$0xf]
    %v860 = vld [vmem:[#allocation7 + $0x174] sm:$0xf]
    %v861 = vld [vmem:[#allocation7 + $0x178] sm:$0xf]
    %v862 = vld [vmem:[#allocation7 + $0x17c] sm:$0xf]
    %v863 = vld [vmem:[#allocation7 + $0x180] sm:$0xf]
    %v864 = vld [vmem:[#allocation7 + $0x184] sm:$0xf]
    %v865 = vld [vmem:[#allocation7 + $0x188] sm:$0xf]
    %v866 = vld [vmem:[#allocation7 + $0x18c] sm:$0xf]
    %v867 = vld [vmem:[#allocation7 + $0x190] sm:$0xf]
    %v868 = vld [vmem:[#allocation7 + $0x194] sm:$0xf]
    %v869 = vld [vmem:[#allocation7 + $0x198] sm:$0xf]
    %v870 = vld [vmem:[#allocation7 + $0x19c] sm:$0xf]
    %v871 = vld [vmem:[#allocation7 + $0x1a0] sm:$0xf]
    %v872 = vld [vmem:[#allocation7 + $0x1a4] sm:$0xf]
    %v873 = vld [vmem:[#allocation7 + $0x1a8] sm:$0xf]
    %v874 = vld [vmem:[#allocation7 + $0x1ac] sm:$0xf]
    %v875 = vld [vmem:[#allocation7 + $0x1b0] sm:$0xf]
    %v876 = vld [vmem:[#allocation7 + $0x1b4] sm:$0xf]
    %v877 = vld [vmem:[#allocation7 + $0x1b8] sm:$0xf]
    %v878 = vld [vmem:[#allocation7 + $0x1bc] sm:$0xf]
    %v879 = vld [vmem:[#allocation7 + $0x1c0] sm:$0xf]
    %v880 = vld [vmem:[#allocation7 + $0x1c4] sm:$0xf]
    %v881 = vld [vmem:[#allocation7 + $0x1c8] sm:$0xf]
    %v882 = vld [vmem:[#allocation7 + $0x1cc] sm:$0xf]
    %v883 = vld [vmem:[#allocation7 + $0x1d0] sm:$0xf]
    %v884 = vld [vmem:[#allocation7 + $0x1d4] sm:$0xf]
    %v885 = vld [vmem:[#allocation7 + $0x1d8] sm:$0xf]
    %v886 = vld [vmem:[#allocation7 + $0x1dc] sm:$0xf]
    %v887 = vld [vmem:[#allocation7 + $0x1e0] sm:$0xf]
    %v888 = vld [vmem:[#allocation7 + $0x1e4] sm:$0xf]
    %v889 = vld [vmem:[#allocation7 + $0x1e8] sm:$0xf]
    %v890 = vld [vmem:[#allocation7 + $0x1ec] sm:$0xf]
    %v891 = vld [vmem:[#allocation7 + $0x1f0] sm:$0xf]
    %v892 = vld [vmem:[#allocation7 + $0x1f4] sm:$0xf]
    %v893 = vld [vmem:[#allocation7 + $0x1f8] sm:$0xf]
    %v894 = vld [vmem:[#allocation7 + $0x1fc] sm:$0xf]
    %v895 = vld [vmem:[#allocation7 + $0x200] sm:$0xf]
    %v896 = vld [vmem:[#allocation7 + $0x204] sm:$0xf]
    %v897 = vld [vmem:[#allocation7 + $0x208] sm:$0xf]
    %v898 = vld [vmem:[#allocation7 + $0x20c] sm:$0xf]
    %v899 = vld [vmem:[#allocation7 + $0x210] sm:$0xf]
    %v900 = vld [vmem:[#allocation7 + $0x214] sm:$0xf]
    %v901 = vld [vmem:[#allocation7 + $0x218] sm:$0xf]
    %v902 = vld [vmem:[#allocation7 + $0x21c] sm:$0xf]
    %v903 = vld [vmem:[#allocation7 + $0x220] sm:$0xf]
    %v904 = vld [vmem:[#allocation7 + $0x224] sm:$0xf]
    %v905 = vld [vmem:[#allocation7 + $0x228] sm:$0xf]
    %v906 = vld [vmem:[#allocation7 + $0x22c] sm:$0xf]
    %v907 = vld [vmem:[#allocation7 + $0x230] sm:$0xf]
    %v908 = vld [vmem:[#allocation7 + $0x234] sm:$0xf]
    %v909 = vld [vmem:[#allocation7 + $0x238] sm:$0xf]
    %v910 = vld [vmem:[#allocation7 + $0x23c] sm:$0xf]
    %v911 = vpack.c.b16 %v719, %v716
    %v912 = vpack.c.b16 %v720, %v717
    %v913 = vpack.c.b16 %v721, %v718
    %v914 = vpack.c.b16 %v722, %v719
    %v915 = vpack.c.b16 %v723, %v720
    %v916 = vpack.c.b16 %v724, %v721
    %v917 = vpack.c.b16 %v725, %v722
    %v918 = vpack.c.b16 %v726, %v723
    %v919 = vpack.c.b16 %v727, %v724
    %v920 = vpack.c.b16 %v728, %v725
    %v921 = vpack.c.b16 %v729, %v726
    %v922 = vpack.c.b16 %v730, %v727
    %v923 = vpack.c.b16 %v731, %v728
    %v924 = vpack.c.b16 %v732, %v729
    %v925 = vpack.c.b16 %v733, %v730
    %v926 = vpack.c.b16 %v734, %v731
    %v927 = vpack.c.b16 %v735, %v732
    %v928 = vpack.c.b16 %v736, %v733
    %v929 = vpack.c.b16 %v737, %v734
    %v930 = vpack.c.b16 %v738, %v735
    %v931 = vpack.c.b16 %v739, %v736
    %v932 = vpack.c.b16 %v740, %v737
    %v933 = vpack.c.b16 %v741, %v738
    %v934 = vpack.c.b16 %v742, %v739
    %v935 = vpack.c.b16 %v716, %v740
    %v936 = vpack.c.b16 %v717, %v741
    %v937 = vpack.c.b16 %v718, %v742
    %v938 = vpack.c.b16 %v743, %v716
    %v939 = vpack.c.b16 %v744, %v717
    %v940 = vpack.c.b16 %v745, %v718
    %v941 = vpack.c.b16 %v746, %v743
    %v942 = vpack.c.b16 %v747, %v744
    %v943 = vpack.c.b16 %v748, %v745
    %v944 = vpack.c.b16 %v749, %v746
    %v945 = vpack.c.b16 %v750, %v747
    %v946 = vpack.c.b16 %v751, %v748
    %v947 = vpack.c.b16 %v752, %v749
    %v948 = vpack.c.b16 %v753, %v750
    %v949 = vpack.c.b16 %v754, %v751
    %v950 = vpack.c.b16 %v755, %v752
    %v951 = vpack.c.b16 %v756, %v753
    %v952 = vpack.c.b16 %v757, %v754
    %v953 = vpack.c.b16 %v758, %v755
    %v954 = vpack.c.b16 %v759, %v756
    %v955 = vpack.c.b16 %v760, %v757
    %v956 = vpack.c.b16 %v761, %v758
    %v957 = vpack.c.b16 %v762, %v759
    %v958 = vpack.c.b16 %v763, %v760
    %v959 = vpack.c.b16 %v764, %v761
    %v960 = vpack.c.b16 %v765, %v762
    %v961 = vpack.c.b16 %v766, %v763
    %v962 = vpack.c.b16 %v716, %v764
    %v963 = vpack.c.b16 %v717, %v765
    %v964 = vpack.c.b16 %v718, %v766
    %v1163 = vunpack.c.l.b16 %v767
    %v1164 = vunpack.c.l.b16 %v768
    %v1165 = vunpack.c.l.b16 %v769
    %v1166 = vunpack.c.l.b16 %v770
    %v1167 = vunpack.c.l.b16 %v771
    %v1168 = vunpack.c.l.b16 %v772
    %v1169 = vunpack.c.l.b16 %v773
    %v1170 = vunpack.c.l.b16 %v774
    %v1171 = vunpack.c.l.b16 %v775
    %v1172 = vunpack.c.l.b16 %v776
    %v1173 = vunpack.c.l.b16 %v777
    %v1174 = vunpack.c.l.b16 %v778
    %v1175 = vunpack.c.l.b16 %v779
    %v1176 = vunpack.c.l.b16 %v780
    %v1177 = vunpack.c.l.b16 %v781
    %v1178 = vunpack.c.l.b16 %v782
    %v1179 = vunpack.c.l.b16 %v783
    %v1180 = vunpack.c.l.b16 %v784
    %v1181 = vunpack.c.l.b16 %v785
    %v1182 = vunpack.c.l.b16 %v786
    %v1183 = vunpack.c.l.b16 %v787
    %v1184 = vunpack.c.l.b16 %v788
    %v1185 = vunpack.c.l.b16 %v789
    %v1186 = vunpack.c.l.b16 %v790
    %v1187 = vunpack.c.l.b16 %v791
    %v1188 = vunpack.c.l.b16 %v792
    %v1189 = vunpack.c.l.b16 %v793
    %v1190 = vunpack.c.l.b16 %v794
    %v1191 = vunpack.c.l.b16 %v795
    %v1192 = vunpack.c.l.b16 %v796
    %v1193 = vunpack.c.l.b16 %v797
    %v1194 = vunpack.c.l.b16 %v798
    %v1195 = vunpack.c.l.b16 %v799
    %v1196 = vunpack.c.l.b16 %v800
    %v1197 = vunpack.c.l.b16 %v801
    %v1198 = vunpack.c.l.b16 %v802
    %v1199 = vunpack.c.l.b16 %v803
    %v1200 = vunpack.c.l.b16 %v804
    %v1201 = vunpack.c.l.b16 %v805
    %v1202 = vunpack.c.l.b16 %v806
    %v1203 = vunpack.c.l.b16 %v807
    %v1204 = vunpack.c.l.b16 %v808
    %v1205 = vunpack.c.l.b16 %v809
    %v1206 = vunpack.c.l.b16 %v810
    %v1207 = vunpack.c.l.b16 %v811
    %v1208 = vunpack.c.l.b16 %v812
    %v1209 = vunpack.c.l.b16 %v813
    %v1210 = vunpack.c.l.b16 %v814
    %v1211 = vunpack.c.l.b16 %v815
    %v1212 = vunpack.c.l.b16 %v816
    %v1213 = vunpack.c.l.b16 %v817
    %v1214 = vunpack.c.l.b16 %v818
    %v1215 = vunpack.c.l.b16 %v819
    %v1216 = vunpack.c.l.b16 %v820
    %v1217 = vunpack.c.l.b16 %v821
    %v1218 = vunpack.c.l.b16 %v822
    %v1219 = vunpack.c.l.b16 %v823
    %v1220 = vunpack.c.l.b16 %v824
    %v1221 = vunpack.c.l.b16 %v825
    %v1222 = vunpack.c.l.b16 %v826
    %v1223 = vunpack.c.l.b16 %v827
    %v1224 = vunpack.c.l.b16 %v828
    %v1225 = vunpack.c.l.b16 %v829
    %v1226 = vunpack.c.l.b16 %v830
    %v1227 = vunpack.c.l.b16 %v831
    %v1228 = vunpack.c.l.b16 %v832
    %v1229 = vunpack.c.l.b16 %v833
    %v1230 = vunpack.c.l.b16 %v834
    %v1231 = vunpack.c.l.b16 %v835
    %v1232 = vunpack.c.l.b16 %v836
    %v1233 = vunpack.c.l.b16 %v837
    %v1234 = vunpack.c.l.b16 %v838
    %v1235 = vunpack.c.l.b16 %v839
    %v1236 = vunpack.c.l.b16 %v840
    %v1237 = vunpack.c.l.b16 %v841
    %v1238 = vunpack.c.l.b16 %v842
    %v1239 = vunpack.c.l.b16 %v843
    %v1240 = vunpack.c.l.b16 %v844
    %v1241 = vunpack.c.l.b16 %v845
    %v1242 = vunpack.c.l.b16 %v846
    %v1243 = vunpack.c.l.b16 %v847
    %v1244 = vunpack.c.l.b16 %v848
    %v1245 = vunpack.c.l.b16 %v849
    %v1246 = vunpack.c.l.b16 %v850
    %v1247 = vunpack.c.l.b16 %v851
    %v1248 = vunpack.c.l.b16 %v852
    %v1249 = vunpack.c.l.b16 %v853
    %v1250 = vunpack.c.l.b16 %v854
    %v1251 = vunpack.c.l.b16 %v855
    %v1252 = vunpack.c.l.b16 %v856
    %v1253 = vunpack.c.l.b16 %v857
    %v1254 = vunpack.c.l.b16 %v858
    %v1255 = vunpack.c.l.b16 %v859
    %v1256 = vunpack.c.l.b16 %v860
    %v1257 = vunpack.c.l.b16 %v861
    %v1258 = vunpack.c.l.b16 %v862
    %v1259 = vunpack.c.l.b16 %v863
    %v1260 = vunpack.c.l.b16 %v864
    %v1261 = vunpack.c.l.b16 %v865
    %v1262 = vunpack.c.l.b16 %v866
    %v1263 = vunpack.c.l.b16 %v867
    %v1264 = vunpack.c.l.b16 %v868
    %v1265 = vunpack.c.l.b16 %v869
    %v1266 = vunpack.c.l.b16 %v870
    %v1267 = vunpack.c.l.b16 %v871
    %v1268 = vunpack.c.l.b16 %v872
    %v1269 = vunpack.c.l.b16 %v873
    %v1270 = vunpack.c.l.b16 %v874
    %v1271 = vunpack.c.l.b16 %v875
    %v1272 = vunpack.c.l.b16 %v876
    %v1273 = vunpack.c.l.b16 %v877
    %v1274 = vunpack.c.l.b16 %v878
    %v1275 = vunpack.c.l.b16 %v879
    %v1276 = vunpack.c.l.b16 %v880
    %v1277 = vunpack.c.l.b16 %v881
    %v1278 = vunpack.c.l.b16 %v882
    %v1279 = vunpack.c.l.b16 %v883
    %v1280 = vunpack.c.l.b16 %v884
    %v1281 = vunpack.c.l.b16 %v885
    %v1282 = vunpack.c.l.b16 %v886
    %v1283 = vunpack.c.l.b16 %v887
    %v1284 = vunpack.c.l.b16 %v888
    %v1285 = vunpack.c.l.b16 %v889
    %v1286 = vunpack.c.l.b16 %v890
    %v1287 = vunpack.c.l.b16 %v891
    %v1288 = vunpack.c.l.b16 %v892
    %v1289 = vunpack.c.l.b16 %v893
    %v1290 = vunpack.c.l.b16 %v894
    %v1291 = vunpack.c.l.b16 %v895
    %v1292 = vunpack.c.l.b16 %v896
    %v1293 = vunpack.c.l.b16 %v897
    %v1294 = vunpack.c.l.b16 %v898
    %v1295 = vunpack.c.l.b16 %v899
    %v1296 = vunpack.c.l.b16 %v900
    %v1297 = vunpack.c.l.b16 %v901
    %v1298 = vunpack.c.l.b16 %v902
    %v1299 = vunpack.c.l.b16 %v903
    %v1300 = vunpack.c.l.b16 %v904
    %v1301 = vunpack.c.l.b16 %v905
    %v1302 = vunpack.c.l.b16 %v906
    %v1303 = vunpack.c.l.b16 %v907
    %v1304 = vunpack.c.l.b16 %v908
    %v1305 = vunpack.c.l.b16 %v909
    %v1306 = vunpack.c.l.b16 %v910
    %v1307 = vpack.c.b16 %v1164, %v1163
    %v1308 = vpack.c.b16 %v1166, %v1165
    %v1309 = vpack.c.b16 %v1168, %v1167
    %v1310 = vpack.c.b16 %v1170, %v1169
    %v1311 = vpack.c.b16 %v1172, %v1171
    %v1312 = vpack.c.b16 %v1174, %v1173
    %v1313 = vpack.c.b16 %v1176, %v1175
    %v1314 = vpack.c.b16 %v1178, %v1177
    %v1315 = vpack.c.b16 %v1180, %v1179
    %v1316 = vpack.c.b16 %v1182, %v1181
    %v1317 = vpack.c.b16 %v1184, %v1183
    %v1318 = vpack.c.b16 %v1186, %v1185
    %v1319 = vpack.c.b16 %v1188, %v1187
    %v1320 = vpack.c.b16 %v1190, %v1189
    %v1321 = vpack.c.b16 %v1192, %v1191
    %v1322 = vpack.c.b16 %v1194, %v1193
    %v1323 = vpack.c.b16 %v1196, %v1195
    %v1324 = vpack.c.b16 %v1198, %v1197
    %v1325 = vpack.c.b16 %v1200, %v1199
    %v1326 = vpack.c.b16 %v1202, %v1201
    %v1327 = vpack.c.b16 %v1204, %v1203
    %v1328 = vpack.c.b16 %v1206, %v1205
    %v1329 = vpack.c.b16 %v1208, %v1207
    %v1330 = vpack.c.b16 %v1210, %v1209
    %v1331 = vpack.c.b16 %v1212, %v1211
    %v1332 = vpack.c.b16 %v1214, %v1213
    %v1333 = vpack.c.b16 %v1216, %v1215
    %v1334 = vpack.c.b16 %v1218, %v1217
    %v1335 = vpack.c.b16 %v1220, %v1219
    %v1336 = vpack.c.b16 %v1222, %v1221
    %v1337 = vpack.c.b16 %v1224, %v1223
    %v1338 = vpack.c.b16 %v1226, %v1225
    %v1339 = vpack.c.b16 %v1228, %v1227
    %v1340 = vpack.c.b16 %v1230, %v1229
    %v1341 = vpack.c.b16 %v1232, %v1231
    %v1342 = vpack.c.b16 %v1234, %v1233
    %v1343 = vpack.c.b16 %v1236, %v1235
    %v1344 = vpack.c.b16 %v1238, %v1237
    %v1345 = vpack.c.b16 %v1240, %v1239
    %v1346 = vpack.c.b16 %v1242, %v1241
    %v1347 = vpack.c.b16 %v1244, %v1243
    %v1348 = vpack.c.b16 %v1246, %v1245
    %v1349 = vpack.c.b16 %v1248, %v1247
    %v1350 = vpack.c.b16 %v1250, %v1249
    %v1351 = vpack.c.b16 %v1252, %v1251
    %v1352 = vpack.c.b16 %v1254, %v1253
    %v1353 = vpack.c.b16 %v1256, %v1255
    %v1354 = vpack.c.b16 %v1258, %v1257
    %v1355 = vpack.c.b16 %v1260, %v1259
    %v1356 = vpack.c.b16 %v1262, %v1261
    %v1357 = vpack.c.b16 %v1264, %v1263
    %v1358 = vpack.c.b16 %v1266, %v1265
    %v1359 = vpack.c.b16 %v1268, %v1267
    %v1360 = vpack.c.b16 %v1270, %v1269
    %v1361 = vpack.c.b16 %v1272, %v1271
    %v1362 = vpack.c.b16 %v1274, %v1273
    %v1363 = vpack.c.b16 %v1276, %v1275
    %v1364 = vpack.c.b16 %v1278, %v1277
    %v1365 = vpack.c.b16 %v1280, %v1279
    %v1366 = vpack.c.b16 %v1282, %v1281
    %v1367 = vpack.c.b16 %v1284, %v1283
    %v1368 = vpack.c.b16 %v1286, %v1285
    %v1369 = vpack.c.b16 %v1288, %v1287
    %v1370 = vpack.c.b16 %v1290, %v1289
    %v1371 = vpack.c.b16 %v1292, %v1291
    %v1372 = vpack.c.b16 %v1294, %v1293
    %v1373 = vpack.c.b16 %v1296, %v1295
    %v1374 = vpack.c.b16 %v1298, %v1297
    %v1375 = vpack.c.b16 %v1300, %v1299
    %v1376 = vpack.c.b16 %v1302, %v1301
    %v1377 = vpack.c.b16 %v1304, %v1303
    %v1378 = vpack.c.b16 %v1306, %v1305
    %1451 = vmatprep.subr.bf16.mxu0 0
    %1452 = vmatpush1.bf16.msra.mxu0 %v1307
    %1453 = vmatprep.subr.bf16.mxu0 0
    %1454 = vmatpush1.bf16.msra.mxu0 %v1308
    %1455 = vmatprep.subr.bf16.mxu0 0
    %1456 = vmatpush1.bf16.msra.mxu0 %v1309
    %1457 = vmatprep.subr.bf16.mxu0 0
    %1458 = vmatpush1.bf16.msra.mxu0 %v1310
    %1459 = vmatprep.subr.bf16.mxu0 0
    %1460 = vmatpush1.bf16.msra.mxu0 %v1311
    %1461 = vmatprep.subr.bf16.mxu0 0
    %1462 = vmatpush1.bf16.msra.mxu0 %v1312
    %1463 = vmatprep.subr.bf16.mxu0 0
    %1464 = vmatpush1.bf16.msra.mxu0 %v1313
    %1465 = vmatprep.subr.bf16.mxu0 0
    %1466 = vmatpush1.bf16.msra.mxu0 %v1314
    %1467 = vmatprep.subr.bf16.mxu0 0
    %1468 = vmatpush1.bf16.msra.mxu0 %v1315
    %1469 = vmatprep.subr.bf16.mxu0 0
    %1470 = vmatpush1.bf16.msra.mxu0 %v1316
    %1471 = vmatprep.subr.bf16.mxu0 0
    %1472 = vmatpush1.bf16.msra.mxu0 %v1317
    %1473 = vmatprep.subr.bf16.mxu0 0
    %1474 = vmatpush1.bf16.msra.mxu0 %v1318
    %1475 = vmatprep.subr.bf16.mxu0 0
    %1476 = vmatpush1.bf16.msra.mxu0 %v1319
    %1477 = vmatprep.subr.bf16.mxu0 0
    %1478 = vmatpush1.bf16.msra.mxu0 %v1320
    %1479 = vmatprep.subr.bf16.mxu0 0
    %1480 = vmatpush1.bf16.msra.mxu0 %v1321
    %1481 = vmatprep.subr.bf16.mxu0 0
    %1482 = vmatpush1.bf16.msra.mxu0 %v1322
    %1483 = vmatprep.mubr.bf16.mxu0 %v912
    %1484 = vmatmul.mubr.bf16.gmra.mrb[0].mxu0 %v911
    %v1485 = vpop.f32.mrb[0].mxu0
    %v1486 = vadd.f32 0.0, %v1485
    %v1487 = vpop.f32.mrb[0].mxu0
    %v1488 = vpop.f32.mrb[0].mxu0
    %v1489 = vadd.f32 0.0, %v1488
    %v1490 = vpop.f32.mrb[0].mxu0
    %1491 = vmatprep.mubr.bf16.mxu0 %v918
    %1492 = vmatmul.mubr.bf16.gmra.mrb[0].mxu0 %v917
    %v1493 = vpop.f32.mrb[0].mxu0
    %v1494 = vadd.f32 0.0, %v1493
    %v1495 = vpop.f32.mrb[0].mxu0
    %v1496 = vpop.f32.mrb[0].mxu0
    %v1497 = vadd.f32 0.0, %v1496
    %v1498 = vpop.f32.mrb[0].mxu0
    %1499 = vmatprep.mubr.bf16.mxu0 %v924
    %1500 = vmatmul.mubr.bf16.gmra.mrb[0].mxu0 %v923
    %v1501 = vpop.f32.mrb[0].mxu0
    %v1502 = vadd.f32 0.0, %v1501
    %v1503 = vpop.f32.mrb[0].mxu0
    %v1504 = vpop.f32.mrb[0].mxu0
    %v1505 = vadd.f32 0.0, %v1504
    %v1506 = vpop.f32.mrb[0].mxu0
    %1507 = vmatprep.mubr.bf16.mxu0 %v930
    %1508 = vmatmul.mubr.bf16.gmra.mrb[0].mxu0 %v929
    %v1509 = vpop.f32.mrb[0].mxu0
    %v1510 = vadd.f32 0.0, %v1509
    %v1511 = vpop.f32.mrb[0].mxu0
    %v1512 = vpop.f32.mrb[0].mxu0
    %v1513 = vadd.f32 0.0, %v1512
    %v1514 = vpop.f32.mrb[0].mxu0
    %1515 = vmatprep.mubr.bf16.mxu0 %v939
    %1516 = vmatmul.mubr.bf16.gmra.mrb[0].mxu0 %v938
    %v1517 = vpop.f32.mrb[0].mxu0
    %v1518 = vadd.f32 0.0, %v1517
    %v1519 = vpop.f32.mrb[0].mxu0
    %v1520 = vpop.f32.mrb[0].mxu0
    %v1521 = vadd.f32 0.0, %v1520
    %v1522 = vpop.f32.mrb[0].mxu0
    %1523 = vmatprep.mubr.bf16.mxu0 %v945
    %1524 = vmatmul.mubr.bf16.gmra.mrb[0].mxu0 %v944
    %v1525 = vpop.f32.mrb[0].mxu0
    %v1526 = vadd.f32 0.0, %v1525
    %v1527 = vpop.f32.mrb[0].mxu0
    %v1528 = vpop.f32.mrb[0].mxu0
    %v1529 = vadd.f32 0.0, %v1528
    %v1530 = vpop.f32.mrb[0].mxu0
    %1531 = vmatprep.mubr.bf16.mxu0 %v951
    %1532 = vmatmul.mubr.bf16.gmra.mrb[0].mxu0 %v950
    %v1533 = vpop.f32.mrb[0].mxu0
    %v1534 = vadd.f32 0.0, %v1533
    %v1535 = vpop.f32.mrb[0].mxu0
    %v1536 = vpop.f32.mrb[0].mxu0
    %v1537 = vadd.f32 0.0, %v1536
    %v1538 = vpop.f32.mrb[0].mxu0
    %1539 = vmatprep.mubr.bf16.mxu0 %v957
    %1540 = vmatmul.mubr.bf16.gmra.mrb[0].mxu0 %v956
    %v1541 = vpop.f32.mrb[0].mxu0
    %v1542 = vadd.f32 0.0, %v1541
    %v1543 = vpop.f32.mrb[0].mxu0
    %v1544 = vpop.f32.mrb[0].mxu0
    %v1545 = vadd.f32 0.0, %v1544
    %v1546 = vpop.f32.mrb[0].mxu0
    %1547 = vdwg.mxu0
    %1548 = vmatprep.subr.bf16.mxu0 0
    %1549 = vmatpush1.bf16.msra.mxu0 %v1323
    %1550 = vmatprep.subr.bf16.mxu0 0
    %1551 = vmatpush1.bf16.msra.mxu0 %v1324
    %1552 = vmatprep.subr.bf16.mxu0 0
    %1553 = vmatpush1.bf16.msra.mxu0 %v1325
    %1554 = vmatprep.subr.bf16.mxu0 0
    %1555 = vmatpush1.bf16.msra.mxu0 %v1326
    %1556 = vmatprep.subr.bf16.mxu0 0
    %1557 = vmatpush1.bf16.msra.mxu0 %v1327
    %1558 = vmatprep.subr.bf16.mxu0 0
    %1559 = vmatpush1.bf16.msra.mxu0 %v1328
    %1560 = vmatprep.subr.bf16.mxu0 0
    %1561 = vmatpush1.bf16.msra.mxu0 %v1329
    %1562 = vmatprep.subr.bf16.mxu0 0
    %1563 = vmatpush1.bf16.msra.mxu0 %v1330
    %1564 = vmatprep.subr.bf16.mxu0 0
    %1565 = vmatpush1.bf16.msra.mxu0 %v1331
    %1566 = vmatprep.subr.bf16.mxu0 0
    %1567 = vmatpush1.bf16.msra.mxu0 %v1332
    %1568 = vmatprep.subr.bf16.mxu0 0
    %1569 = vmatpush1.bf16.msra.mxu0 %v1333
    %1570 = vmatprep.subr.bf16.mxu0 0
    %1571 = vmatpush1.bf16.msra.mxu0 %v1334
    %1572 = vmatprep.subr.bf16.mxu0 0
    %1573 = vmatpush1.bf16.msra.mxu0 %v1335
    %1574 = vmatprep.subr.bf16.mxu0 0
    %1575 = vmatpush1.bf16.msra.mxu0 %v1336
    %1576 = vmatprep.subr.bf16.mxu0 0
    %1577 = vmatpush1.bf16.msra.mxu0 %v1337
    %1578 = vmatprep.subr.bf16.mxu0 0
    %1579 = vmatpush1.bf16.msra.mxu0 %v1338
    %1580 = vmatprep.mubr.bf16.mxu0 %v914
    %1581 = vmatmul.mubr.bf16.gmra.mrb[0].mxu0 %v913
    %v1582 = vpop.f32.mrb[0].mxu0
    %v1583 = vadd.f32 %v1486, %v1582
    %v1584 = vpop.f32.mrb[0].mxu0
    %v1585 = vpop.f32.mrb[0].mxu0
    %v1586 = vadd.f32 %v1489, %v1585
    %v1587 = vpop.f32.mrb[0].mxu0
    %1588 = vmatprep.mubr.bf16.mxu0 %v920
    %1589 = vmatmul.mubr.bf16.gmra.mrb[0].mxu0 %v919
    %v1590 = vpop.f32.mrb[0].mxu0
    %v1591 = vadd.f32 %v1494, %v1590
    %v1592 = vpop.f32.mrb[0].mxu0
    %v1593 = vpop.f32.mrb[0].mxu0
    %v1594 = vadd.f32 %v1497, %v1593
    %v1595 = vpop.f32.mrb[0].mxu0
    %1596 = vmatprep.mubr.bf16.mxu0 %v926
    %1597 = vmatmul.mubr.bf16.gmra.mrb[0].mxu0 %v925
    %v1598 = vpop.f32.mrb[0].mxu0
    %v1599 = vadd.f32 %v1502, %v1598
    %v1600 = vpop.f32.mrb[0].mxu0
    %v1601 = vpop.f32.mrb[0].mxu0
    %v1602 = vadd.f32 %v1505, %v1601
    %v1603 = vpop.f32.mrb[0].mxu0
    %1604 = vmatprep.mubr.bf16.mxu0 %v932
    %1605 = vmatmul.mubr.bf16.gmra.mrb[0].mxu0 %v931
    %v1606 = vpop.f32.mrb[0].mxu0
    %v1607 = vadd.f32 %v1510, %v1606
    %v1608 = vpop.f32.mrb[0].mxu0
    %v1609 = vpop.f32.mrb[0].mxu0
    %v1610 = vadd.f32 %v1513, %v1609
    %v1611 = vpop.f32.mrb[0].mxu0
    %1612 = vmatprep.mubr.bf16.mxu0 %v941
    %1613 = vmatmul.mubr.bf16.gmra.mrb[0].mxu0 %v940
    %v1614 = vpop.f32.mrb[0].mxu0
    %v1615 = vadd.f32 %v1518, %v1614
    %v1616 = vpop.f32.mrb[0].mxu0
    %v1617 = vpop.f32.mrb[0].mxu0
    %v1618 = vadd.f32 %v1521, %v1617
    %v1619 = vpop.f32.mrb[0].mxu0
    %1620 = vmatprep.mubr.bf16.mxu0 %v947
    %1621 = vmatmul.mubr.bf16.gmra.mrb[0].mxu0 %v946
    %v1622 = vpop.f32.mrb[0].mxu0
    %v1623 = vadd.f32 %v1526, %v1622
    %v1624 = vpop.f32.mrb[0].mxu0
    %v1625 = vpop.f32.mrb[0].mxu0
    %v1626 = vadd.f32 %v1529, %v1625
    %v1627 = vpop.f32.mrb[0].mxu0
    %1628 = vmatprep.mubr.bf16.mxu0 %v953
    %1629 = vmatmul.mubr.bf16.gmra.mrb[0].mxu0 %v952
    %v1630 = vpop.f32.mrb[0].mxu0
    %v1631 = vadd.f32 %v1534, %v1630
    %v1632 = vpop.f32.mrb[0].mxu0
    %v1633 = vpop.f32.mrb[0].mxu0
    %v1634 = vadd.f32 %v1537, %v1633
    %v1635 = vpop.f32.mrb[0].mxu0
    %1636 = vmatprep.mubr.bf16.mxu0 %v959
    %1637 = vmatmul.mubr.bf16.gmra.mrb[0].mxu0 %v958
    %v1638 = vpop.f32.mrb[0].mxu0
    %v1639 = vadd.f32 %v1542, %v1638
    %v1640 = vpop.f32.mrb[0].mxu0
    %v1641 = vpop.f32.mrb[0].mxu0
    %v1642 = vadd.f32 %v1545, %v1641
    %v1643 = vpop.f32.mrb[0].mxu0
    %1644 = vdwg.mxu0
    %1645 = vmatprep.subr.bf16.mxu0 0
    %1646 = vmatpush1.bf16.msra.mxu0 %v1339
    %1647 = vmatprep.subr.bf16.mxu0 0
    %1648 = vmatpush1.bf16.msra.mxu0 %v1340
    %1649 = vmatprep.subr.bf16.mxu0 0
    %1650 = vmatpush1.bf16.msra.mxu0 %v1341
    %1651 = vmatprep.subr.bf16.mxu0 0
    %1652 = vmatpush1.bf16.msra.mxu0 %v1342
    %1653 = vmatprep.subr.bf16.mxu0 0
    %1654 = vmatpush1.bf16.msra.mxu0 %v1343
    %1655 = vmatprep.subr.bf16.mxu0 0
    %1656 = vmatpush1.bf16.msra.mxu0 %v1344
    %1657 = vmatprep.subr.bf16.mxu0 0
    %1658 = vmatpush1.bf16.msra.mxu0 %v1345
    %1659 = vmatprep.subr.bf16.mxu0 0
    %1660 = vmatpush1.bf16.msra.mxu0 %v1346
    %1661 = vmatprep.subr.bf16.mxu0 0
    %1662 = vmatpush1.bf16.msra.mxu0 %v1347
    %1663 = vmatprep.subr.bf16.mxu0 0
    %1664 = vmatpush1.bf16.msra.mxu0 %v1348
    %1665 = vmatprep.subr.bf16.mxu0 0
    %1666 = vmatpush1.bf16.msra.mxu0 %v1349
    %1667 = vmatprep.subr.bf16.mxu0 0
    %1668 = vmatpush1.bf16.msra.mxu0 %v1350
    %1669 = vmatprep.subr.bf16.mxu0 0
    %1670 = vmatpush1.bf16.msra.mxu0 %v1351
    %1671 = vmatprep.subr.bf16.mxu0 0
    %1672 = vmatpush1.bf16.msra.mxu0 %v1352
    %1673 = vmatprep.subr.bf16.mxu0 0
    %1674 = vmatpush1.bf16.msra.mxu0 %v1353
    %1675 = vmatprep.subr.bf16.mxu0 0
    %1676 = vmatpush1.bf16.msra.mxu0 %v1354
    %1677 = vmatprep.mubr.bf16.mxu0 %v916
    %1678 = vmatmul.mubr.bf16.gmra.mrb[0].mxu0 %v915
    %v1679 = vpop.f32.mrb[0].mxu0
    %v1680 = vadd.f32 %v1583, %v1679
    %v1681 = vpop.f32.mrb[0].mxu0
    %v1682 = vpop.f32.mrb[0].mxu0
    %v1683 = vadd.f32 %v1586, %v1682
    %v1684 = vpop.f32.mrb[0].mxu0
    %1685 = vmatprep.mubr.bf16.mxu0 %v922
    %1686 = vmatmul.mubr.bf16.gmra.mrb[0].mxu0 %v921
    %v1687 = vpop.f32.mrb[0].mxu0
    %v1688 = vadd.f32 %v1591, %v1687
    %v1689 = vpop.f32.mrb[0].mxu0
    %v1690 = vpop.f32.mrb[0].mxu0
    %v1691 = vadd.f32 %v1594, %v1690
    %v1692 = vpop.f32.mrb[0].mxu0
    %1693 = vmatprep.mubr.bf16.mxu0 %v928
    %1694 = vmatmul.mubr.bf16.gmra.mrb[0].mxu0 %v927
    %v1695 = vpop.f32.mrb[0].mxu0
    %v1696 = vadd.f32 %v1599, %v1695
    %v1697 = vpop.f32.mrb[0].mxu0
    %v1698 = vpop.f32.mrb[0].mxu0
    %v1699 = vadd.f32 %v1602, %v1698
    %v1700 = vpop.f32.mrb[0].mxu0
    %1701 = vmatprep.mubr.bf16.mxu0 %v934
    %1702 = vmatmul.mubr.bf16.gmra.mrb[0].mxu0 %v933
    %v1703 = vpop.f32.mrb[0].mxu0
    %v1704 = vadd.f32 %v1607, %v1703
    %v1705 = vpop.f32.mrb[0].mxu0
    %v1706 = vpop.f32.mrb[0].mxu0
    %v1707 = vadd.f32 %v1610, %v1706
    %v1708 = vpop.f32.mrb[0].mxu0
    %1709 = vmatprep.mubr.bf16.mxu0 %v943
    %1710 = vmatmul.mubr.bf16.gmra.mrb[0].mxu0 %v942
    %v1711 = vpop.f32.mrb[0].mxu0
    %v1712 = vadd.f32 %v1615, %v1711
    %v1713 = vpop.f32.mrb[0].mxu0
    %v1714 = vpop.f32.mrb[0].mxu0
    %v1715 = vadd.f32 %v1618, %v1714
    %v1716 = vpop.f32.mrb[0].mxu0
    %1717 = vmatprep.mubr.bf16.mxu0 %v949
    %1718 = vmatmul.mubr.bf16.gmra.mrb[0].mxu0 %v948
    %v1719 = vpop.f32.mrb[0].mxu0
    %v1720 = vadd.f32 %v1623, %v1719
    %v1721 = vpop.f32.mrb[0].mxu0
    %v1722 = vpop.f32.mrb[0].mxu0
    %v1723 = vadd.f32 %v1626, %v1722
    %v1724 = vpop.f32.mrb[0].mxu0
    %1725 = vmatprep.mubr.bf16.mxu0 %v955
    %1726 = vmatmul.mubr.bf16.gmra.mrb[0].mxu0 %v954
    %v1727 = vpop.f32.mrb[0].mxu0
    %v1728 = vadd.f32 %v1631, %v1727
    %v1729 = vpop.f32.mrb[0].mxu0
    %v1730 = vpop.f32.mrb[0].mxu0
    %v1731 = vadd.f32 %v1634, %v1730
    %v1732 = vpop.f32.mrb[0].mxu0
    %1733 = vmatprep.mubr.bf16.mxu0 %v961
    %1734 = vmatmul.mubr.bf16.gmra.mrb[0].mxu0 %v960
    %v1735 = vpop.f32.mrb[0].mxu0
    %v1736 = vadd.f32 %v1639, %v1735
    %v1737 = vpop.f32.mrb[0].mxu0
    %v1738 = vpop.f32.mrb[0].mxu0
    %v1739 = vadd.f32 %v1642, %v1738
    %v1740 = vpop.f32.mrb[0].mxu0
    %1741 = vdwg.mxu0
    %1742 = vmatprep.subr.bf16.mxu0 0
    %1743 = vmatpush1.bf16.msra.mxu0 %v1355
    %1744 = vmatprep.subr.bf16.mxu0 0
    %1745 = vmatpush1.bf16.msra.mxu0 %v1356
    %1746 = vmatprep.subr.bf16.mxu0 0
    %1747 = vmatpush1.bf16.msra.mxu0 %v1357
    %1748 = vmatprep.subr.bf16.mxu0 0
    %1749 = vmatpush1.bf16.msra.mxu0 %v1358
    %1750 = vmatprep.subr.bf16.mxu0 0
    %1751 = vmatpush1.bf16.msra.mxu0 %v1359
    %1752 = vmatprep.subr.bf16.mxu0 0
    %1753 = vmatpush1.bf16.msra.mxu0 %v1360
    %1754 = vmatprep.subr.bf16.mxu0 0
    %1755 = vmatpush1.bf16.msra.mxu0 %v1361
    %1756 = vmatprep.subr.bf16.mxu0 0
    %1757 = vmatpush1.bf16.msra.mxu0 %v1362
    %1758 = vmatprep.subr.bf16.mxu0 0
    %1759 = vmatpush1.bf16.msra.mxu0 %v1363
    %1760 = vmatprep.subr.bf16.mxu0 0
    %1761 = vmatpush1.bf16.msra.mxu0 %v1364
    %1762 = vmatprep.subr.bf16.mxu0 0
    %1763 = vmatpush1.bf16.msra.mxu0 %v1365
    %1764 = vmatprep.subr.bf16.mxu0 0
    %1765 = vmatpush1.bf16.msra.mxu0 %v1366
    %1766 = vmatprep.subr.bf16.mxu0 0
    %1767 = vmatpush1.bf16.msra.mxu0 %v1367
    %1768 = vmatprep.subr.bf16.mxu0 0
    %1769 = vmatpush1.bf16.msra.mxu0 %v1368
    %1770 = vmatprep.subr.bf16.mxu0 0
    %1771 = vmatpush1.bf16.msra.mxu0 %v1369
    %1772 = vmatprep.subr.bf16.mxu0 0
    %1773 = vmatpush1.bf16.msra.mxu0 %v1370
    %1774 = vmatprep.mubr.bf16.mxu0 %v918
    %1775 = vmatmul.mubr.bf16.gmra.mrb[0].mxu0 %v917
    %v1776 = vpop.f32.mrb[0].mxu0
    %v1777 = vadd.f32 %v1680, %v1776
    %v1778 = vpop.f32.mrb[0].mxu0
    %v1779 = vpop.f32.mrb[0].mxu0
    %v1780 = vadd.f32 %v1683, %v1779
    %v1781 = vpop.f32.mrb[0].mxu0
    %1782 = vmatprep.mubr.bf16.mxu0 %v924
    %1783 = vmatmul.mubr.bf16.gmra.mrb[0].mxu0 %v923
    %v1784 = vpop.f32.mrb[0].mxu0
    %v1785 = vadd.f32 %v1688, %v1784
    %v1786 = vpop.f32.mrb[0].mxu0
    %v1787 = vpop.f32.mrb[0].mxu0
    %v1788 = vadd.f32 %v1691, %v1787
    %v1789 = vpop.f32.mrb[0].mxu0
    %1790 = vmatprep.mubr.bf16.mxu0 %v930
    %1791 = vmatmul.mubr.bf16.gmra.mrb[0].mxu0 %v929
    %v1792 = vpop.f32.mrb[0].mxu0
    %v1793 = vadd.f32 %v1696, %v1792
    %v1794 = vpop.f32.mrb[0].mxu0
    %v1795 = vpop.f32.mrb[0].mxu0
    %v1796 = vadd.f32 %v1699, %v1795
    %v1797 = vpop.f32.mrb[0].mxu0
    %1798 = vmatprep.mubr.bf16.mxu0 %v936
    %1799 = vmatmul.mubr.bf16.gmra.mrb[0].mxu0 %v935
    %v1800 = vpop.f32.mrb[0].mxu0
    %v1801 = vadd.f32 %v1704, %v1800
    %v1802 = vpop.f32.mrb[0].mxu0
    %v1803 = vpop.f32.mrb[0].mxu0
    %v1804 = vadd.f32 %v1707, %v1803
    %v1805 = vpop.f32.mrb[0].mxu0
    %1806 = vmatprep.mubr.bf16.mxu0 %v945
    %1807 = vmatmul.mubr.bf16.gmra.mrb[0].mxu0 %v944
    %v1808 = vpop.f32.mrb[0].mxu0
    %v1809 = vadd.f32 %v1712, %v1808
    %v1810 = vpop.f32.mrb[0].mxu0
    %v1811 = vpop.f32.mrb[0].mxu0
    %v1812 = vadd.f32 %v1715, %v1811
    %v1813 = vpop.f32.mrb[0].mxu0
    %1814 = vmatprep.mubr.bf16.mxu0 %v951
    %1815 = vmatmul.mubr.bf16.gmra.mrb[0].mxu0 %v950
    %v1816 = vpop.f32.mrb[0].mxu0
    %v1817 = vadd.f32 %v1720, %v1816
    %v1818 = vpop.f32.mrb[0].mxu0
    %v1819 = vpop.f32.mrb[0].mxu0
    %v1820 = vadd.f32 %v1723, %v1819
    %v1821 = vpop.f32.mrb[0].mxu0
    %1822 = vmatprep.mubr.bf16.mxu0 %v957
    %1823 = vmatmul.mubr.bf16.gmra.mrb[0].mxu0 %v956
    %v1824 = vpop.f32.mrb[0].mxu0
    %v1825 = vadd.f32 %v1728, %v1824
    %v1826 = vpop.f32.mrb[0].mxu0
    %v1827 = vpop.f32.mrb[0].mxu0
    %v1828 = vadd.f32 %v1731, %v1827
    %v1829 = vpop.f32.mrb[0].mxu0
    %1830 = vmatprep.mubr.bf16.mxu0 %v963
    %1831 = vmatmul.mubr.bf16.gmra.mrb[0].mxu0 %v962
    %v1832 = vpop.f32.mrb[0].mxu0
    %v1833 = vadd.f32 %v1736, %v1832
    %v1834 = vpop.f32.mrb[0].mxu0
    %v1835 = vpop.f32.mrb[0].mxu0
    %v1836 = vadd.f32 %v1739, %v1835
    %v1837 = vpop.f32.mrb[0].mxu0
    %1838 = vdwg.mxu0
    %1839 = vmatprep.subr.bf16.mxu0 0
    %1840 = vmatpush1.bf16.msra.mxu0 %v1371
    %1841 = vmatprep.subr.bf16.mxu0 0
    %1842 = vmatpush1.bf16.msra.mxu0 %v1372
    %1843 = vmatprep.subr.bf16.mxu0 0
    %1844 = vmatpush1.bf16.msra.mxu0 %v1373
    %1845 = vmatprep.subr.bf16.mxu0 0
    %1846 = vmatpush1.bf16.msra.mxu0 %v1374
    %1847 = vmatprep.subr.bf16.mxu0 0
    %1848 = vmatpush1.bf16.msra.mxu0 %v1375
    %1849 = vmatprep.subr.bf16.mxu0 0
    %1850 = vmatpush1.bf16.msra.mxu0 %v1376
    %1851 = vmatprep.subr.bf16.mxu0 0
    %1852 = vmatpush1.bf16.msra.mxu0 %v1377
    %1853 = vmatprep.subr.bf16.mxu0 0
    %1854 = vmatpush1.bf16.msra.mxu0 %v1378
    %1855 = vmatprep.subr.bf16.mxu0 0
    %1856 = vmatpush1.bf16.msra.mxu0 0
    %1857 = vmatprep.subr.bf16.mxu0 0
    %1858 = vmatpush1.bf16.msra.mxu0 0
    %1859 = vmatprep.subr.bf16.mxu0 0
    %1860 = vmatpush1.bf16.msra.mxu0 0
    %1861 = vmatprep.subr.bf16.mxu0 0
    %1862 = vmatpush1.bf16.msra.mxu0 0
    %1863 = vmatprep.subr.bf16.mxu0 0
    %1864 = vmatpush1.bf16.msra.mxu0 0
    %1865 = vmatprep.subr.bf16.mxu0 0
    %1866 = vmatpush1.bf16.msra.mxu0 0
    %1867 = vmatprep.subr.bf16.mxu0 0
    %1868 = vmatpush1.bf16.msra.mxu0 0
    %1869 = vmatprep.subr.bf16.mxu0 0
    %1870 = vmatpush1.bf16.msra.mxu0 0
    %1871 = vmatprep.mubr.bf16.mxu0 0
    %1872 = vmatmul.mubr.bf16.gmra.mrb[0].mxu0 %v919
    %v1873 = vpop.f32.mrb[0].mxu0
    %v1874 = vadd.f32 %v1777, %v1873
    %v1875 = vpop.f32.mrb[0].mxu0
    %v1876 = vpop.f32.mrb[0].mxu0
    %v1877 = vadd.f32 %v1780, %v1876
    %v1878 = vpop.f32.mrb[0].mxu0
    %1879 = vmatprep.mubr.bf16.mxu0 0
    %1880 = vmatmul.mubr.bf16.gmra.mrb[0].mxu0 %v925
    %v1881 = vpop.f32.mrb[0].mxu0
    %v1882 = vadd.f32 %v1785, %v1881
    %v1883 = vpop.f32.mrb[0].mxu0
    %v1884 = vpop.f32.mrb[0].mxu0
    %v1885 = vadd.f32 %v1788, %v1884
    %v1886 = vpop.f32.mrb[0].mxu0
    %1887 = vmatprep.mubr.bf16.mxu0 0
    %1888 = vmatmul.mubr.bf16.gmra.mrb[0].mxu0 %v931
    %v1889 = vpop.f32.mrb[0].mxu0
    %v1890 = vadd.f32 %v1793, %v1889
    %v1891 = vpop.f32.mrb[0].mxu0
    %v1892 = vpop.f32.mrb[0].mxu0
    %v1893 = vadd.f32 %v1796, %v1892
    %v1894 = vpop.f32.mrb[0].mxu0
    %1895 = vmatprep.mubr.bf16.mxu0 0
    %1896 = vmatmul.mubr.bf16.gmra.mrb[0].mxu0 %v937
    %v1897 = vpop.f32.mrb[0].mxu0
    %v1898 = vadd.f32 %v1801, %v1897
    %v1899 = vpop.f32.mrb[0].mxu0
    %v1900 = vpop.f32.mrb[0].mxu0
    %v1901 = vadd.f32 %v1804, %v1900
    %v1902 = vpop.f32.mrb[0].mxu0
    %1903 = vmatprep.mubr.bf16.mxu0 0
    %1904 = vmatmul.mubr.bf16.gmra.mrb[0].mxu0 %v946
    %v1905 = vpop.f32.mrb[0].mxu0
    %v1906 = vadd.f32 %v1809, %v1905
    %v1907 = vpop.f32.mrb[0].mxu0
    %v1908 = vpop.f32.mrb[0].mxu0
    %v1909 = vadd.f32 %v1812, %v1908
    %v1910 = vpop.f32.mrb[0].mxu0
    %1911 = vmatprep.mubr.bf16.mxu0 0
    %1912 = vmatmul.mubr.bf16.gmra.mrb[0].mxu0 %v952
    %v1913 = vpop.f32.mrb[0].mxu0
    %v1914 = vadd.f32 %v1817, %v1913
    %v1915 = vpop.f32.mrb[0].mxu0
    %v1916 = vpop.f32.mrb[0].mxu0
    %v1917 = vadd.f32 %v1820, %v1916
    %v1918 = vpop.f32.mrb[0].mxu0
    %1919 = vmatprep.mubr.bf16.mxu0 0
    %1920 = vmatmul.mubr.bf16.gmra.mrb[0].mxu0 %v958
    %v1921 = vpop.f32.mrb[0].mxu0
    %v1922 = vadd.f32 %v1825, %v1921
    %v1923 = vpop.f32.mrb[0].mxu0
    %v1924 = vpop.f32.mrb[0].mxu0
    %v1925 = vadd.f32 %v1828, %v1924
    %v1926 = vpop.f32.mrb[0].mxu0
    %1927 = vmatprep.mubr.bf16.mxu0 0
    %1928 = vmatmul.mubr.bf16.gmra.mrb[0].mxu0 %v964
    %v1929 = vpop.f32.mrb[0].mxu0
    %v1930 = vadd.f32 %v1833, %v1929
    %v1931 = vpop.f32.mrb[0].mxu0
    %v1932 = vpop.f32.mrb[0].mxu0
    %v1933 = vadd.f32 %v1836, %v1932
    %v1934 = vpop.f32.mrb[0].mxu0
    %1935 = vdwg.mxu0
    %v1936 = vld [vmem:[%s5] sm:$0x1]
    %v1938 = vlaneseq
    %v1939 = vshrl.u32 %v1938, 7
    %v1940 = vsub.s32 0, %v1939
    %v1941 = vrot.slane %v1936, %v1940
    %v1943 = vmul.f32 %v1874, %v1941
    %v1944 = vmul.f32 %v1877, %v1941
    %v1945 = vmul.f32 %v1882, %v1941
    %v1946 = vmul.f32 %v1885, %v1941
    %v1947 = vmul.f32 %v1890, %v1941
    %v1948 = vmul.f32 %v1893, %v1941
    %v1949 = vmul.f32 %v1898, %v1941
    %v1950 = vmul.f32 %v1901, %v1941
    %v1951 = vmul.f32 %v1906, %v1941
    %v1952 = vmul.f32 %v1909, %v1941
    %v1953 = vmul.f32 %v1914, %v1941
    %v1954 = vmul.f32 %v1917, %v1941
    %v1955 = vmul.f32 %v1922, %v1941
    %v1956 = vmul.f32 %v1925, %v1941
    %v1957 = vmul.f32 %v1930, %v1941
    %v1958 = vmul.f32 %v1933, %v1941
    %v1959 = vld [vmem:[%s6] sm:$0x1]
    %v1961 = vlaneseq
    %v1962 = vshrl.u32 %v1961, 7
    %v1963 = vsub.s32 0, %v1962
    %v1964 = vrot.slane %v1959, %v1963
    %v1966 = vadd.f32 %v1943, %v1964
    %v1967 = vadd.f32 %v1944, %v1964
    %v1968 = vadd.f32 %v1945, %v1964
    %v1969 = vadd.f32 %v1946, %v1964
    %v1970 = vadd.f32 %v1947, %v1964
    %v1971 = vadd.f32 %v1948, %v1964
    %v1972 = vadd.f32 %v1949, %v1964
    %v1973 = vadd.f32 %v1950, %v1964
    %v1974 = vadd.f32 %v1951, %v1964
    %v1975 = vadd.f32 %v1952, %v1964
    %v1976 = vadd.f32 %v1953, %v1964
    %v1977 = vadd.f32 %v1954, %v1964
    %v1978 = vadd.f32 %v1955, %v1964
    %v1979 = vadd.f32 %v1956, %v1964
    %v1980 = vadd.f32 %v1957, %v1964
    %v1981 = vadd.f32 %v1958, %v1964
    %v1982 = vmax.f32 %v1966, 0.0
    %v1983 = vmax.f32 %v1967, 0.0
    %v1984 = vmax.f32 %v1968, 0.0
    %v1985 = vmax.f32 %v1969, 0.0
    %v1986 = vmax.f32 %v1970, 0.0
    %v1987 = vmax.f32 %v1971, 0.0
    %v1988 = vmax.f32 %v1972, 0.0
    %v1989 = vmax.f32 %v1973, 0.0
    %v1990 = vmax.f32 %v1974, 0.0
    %v1991 = vmax.f32 %v1975, 0.0
    %v1992 = vmax.f32 %v1976, 0.0
    %v1993 = vmax.f32 %v1977, 0.0
    %v1994 = vmax.f32 %v1978, 0.0
    %v1995 = vmax.f32 %v1979, 0.0
    %v1996 = vmax.f32 %v1980, 0.0
    %v1997 = vmax.f32 %v1981, 0.0
    %v1998 = vpack.c.bf16 %v1983, %v1982
    %v1999 = vpack.c.bf16 %v1985, %v1984
    %v2000 = vpack.c.bf16 %v1987, %v1986
    %v2001 = vpack.c.bf16 %v1989, %v1988
    %v2002 = vpack.c.bf16 %v1991, %v1990
    %v2003 = vpack.c.bf16 %v1993, %v1992
    %v2004 = vpack.c.bf16 %v1995, %v1994
    %v2005 = vpack.c.bf16 %v1997, %v1996
    %v2006 = vld [vmem:[#allocation8] sm:$0xf]
    %v2007 = vld [vmem:[#allocation8 + $0x4] sm:$0xf]
    %v2008 = vld [vmem:[#allocation8 + $0x8] sm:$0xf]
    %v2009 = vld [vmem:[#allocation8 + $0xc] sm:$0xf]
    %v2010 = vld [vmem:[#allocation8 + $0x10] sm:$0xf]
    %v2011 = vld [vmem:[#allocation8 + $0x14] sm:$0xf]
    %v2012 = vld [vmem:[#allocation8 + $0x18] sm:$0xf]
    %v2013 = vld [vmem:[#allocation8 + $0x1c] sm:$0xf]
    %v2014 = vld [vmem:[#allocation8 + $0x20] sm:$0xf]
    %v2015 = vld [vmem:[#allocation8 + $0x24] sm:$0xf]
    %v2016 = vld [vmem:[#allocation8 + $0x28] sm:$0xf]
    %v2017 = vld [vmem:[#allocation8 + $0x2c] sm:$0xf]
    %v2018 = vld [vmem:[#allocation8 + $0x30] sm:$0xf]
    %v2019 = vld [vmem:[#allocation8 + $0x34] sm:$0xf]
    %v2020 = vld [vmem:[#allocation8 + $0x38] sm:$0xf]
    %v2021 = vld [vmem:[#allocation8 + $0x3c] sm:$0xf]
    %v2038 = vunpack.c.l.b16 %v2006
    %v2039 = vunpack.c.l.b16 %v2007
    %v2040 = vunpack.c.l.b16 %v2008
    %v2041 = vunpack.c.l.b16 %v2009
    %v2042 = vunpack.c.l.b16 %v2010
    %v2043 = vunpack.c.l.b16 %v2011
    %v2044 = vunpack.c.l.b16 %v2012
    %v2045 = vunpack.c.l.b16 %v2013
    %v2046 = vunpack.c.l.b16 %v2014
    %v2047 = vunpack.c.l.b16 %v2015
    %v2048 = vunpack.c.l.b16 %v2016
    %v2049 = vunpack.c.l.b16 %v2017
    %v2050 = vunpack.c.l.b16 %v2018
    %v2051 = vunpack.c.l.b16 %v2019
    %v2052 = vunpack.c.l.b16 %v2020
    %v2053 = vunpack.c.l.b16 %v2021
    %v2054 = vpack.c.b16 %v2039, %v2038
    %v2055 = vpack.c.b16 %v2041, %v2040
    %v2056 = vpack.c.b16 %v2043, %v2042
    %v2057 = vpack.c.b16 %v2045, %v2044
    %v2058 = vpack.c.b16 %v2047, %v2046
    %v2059 = vpack.c.b16 %v2049, %v2048
    %v2060 = vpack.c.b16 %v2051, %v2050
    %v2061 = vpack.c.b16 %v2053, %v2052
    %2070 = vmatprep.subr.bf16.mxu0 0
    %2071 = vmatpush1.bf16.msra.mxu0 %v2054
    %2072 = vmatprep.subr.bf16.mxu0 0
    %2073 = vmatpush1.bf16.msra.mxu0 %v2055
    %2074 = vmatprep.subr.bf16.mxu0 0
    %2075 = vmatpush1.bf16.msra.mxu0 %v2056
    %2076 = vmatprep.subr.bf16.mxu0 0
    %2077 = vmatpush1.bf16.msra.mxu0 %v2057
    %2078 = vmatprep.subr.bf16.mxu0 0
    %2079 = vmatpush1.bf16.msra.mxu0 %v2058
    %2080 = vmatprep.subr.bf16.mxu0 0
    %2081 = vmatpush1.bf16.msra.mxu0 %v2059
    %2082 = vmatprep.subr.bf16.mxu0 0
    %2083 = vmatpush1.bf16.msra.mxu0 %v2060
    %2084 = vmatprep.subr.bf16.mxu0 0
    %2085 = vmatpush1.bf16.msra.mxu0 %v2061
    %2086 = vmatprep.subr.bf16.mxu0 0
    %2087 = vmatpush1.bf16.msra.mxu0 0
    %2088 = vmatprep.subr.bf16.mxu0 0
    %2089 = vmatpush1.bf16.msra.mxu0 0
    %2090 = vmatprep.subr.bf16.mxu0 0
    %2091 = vmatpush1.bf16.msra.mxu0 0
    %2092 = vmatprep.subr.bf16.mxu0 0
    %2093 = vmatpush1.bf16.msra.mxu0 0
    %2094 = vmatprep.subr.bf16.mxu0 0
    %2095 = vmatpush1.bf16.msra.mxu0 0
    %2096 = vmatprep.subr.bf16.mxu0 0
    %2097 = vmatpush1.bf16.msra.mxu0 0
    %2098 = vmatprep.subr.bf16.mxu0 0
    %2099 = vmatpush1.bf16.msra.mxu0 0
    %2100 = vmatprep.subr.bf16.mxu0 0
    %2101 = vmatpush1.bf16.msra.mxu0 0
    %2102 = vmatprep.mubr.bf16.mxu0 0
    %2103 = vmatmul.mubr.bf16.gmra.mrb[0].mxu0 %v1998
    %v2104 = vpop.f32.mrb[0].mxu0
    %v2105 = vadd.f32 0.0, %v2104
    %v2106 = vpop.f32.mrb[0].mxu0
    %v2107 = vpop.f32.mrb[0].mxu0
    %v2108 = vadd.f32 0.0, %v2107
    %v2109 = vpop.f32.mrb[0].mxu0
    %2110 = vmatprep.mubr.bf16.mxu0 0
    %2111 = vmatmul.mubr.bf16.gmra.mrb[0].mxu0 %v1999
    %v2112 = vpop.f32.mrb[0].mxu0
    %v2113 = vadd.f32 0.0, %v2112
    %v2114 = vpop.f32.mrb[0].mxu0
    %v2115 = vpop.f32.mrb[0].mxu0
    %v2116 = vadd.f32 0.0, %v2115
    %v2117 = vpop.f32.mrb[0].mxu0
    %2118 = vmatprep.mubr.bf16.mxu0 0
    %2119 = vmatmul.mubr.bf16.gmra.mrb[0].mxu0 %v2000
    %v2120 = vpop.f32.mrb[0].mxu0
    %v2121 = vadd.f32 0.0, %v2120
    %v2122 = vpop.f32.mrb[0].mxu0
    %v2123 = vpop.f32.mrb[0].mxu0
    %v2124 = vadd.f32 0.0, %v2123
    %v2125 = vpop.f32.mrb[0].mxu0
    %2126 = vmatprep.mubr.bf16.mxu0 0
    %2127 = vmatmul.mubr.bf16.gmra.mrb[0].mxu0 %v2001
    %v2128 = vpop.f32.mrb[0].mxu0
    %v2129 = vadd.f32 0.0, %v2128
    %v2130 = vpop.f32.mrb[0].mxu0
    %v2131 = vpop.f32.mrb[0].mxu0
    %v2132 = vadd.f32 0.0, %v2131
    %v2133 = vpop.f32.mrb[0].mxu0
    %2134 = vmatprep.mubr.bf16.mxu0 0
    %2135 = vmatmul.mubr.bf16.gmra.mrb[0].mxu0 %v2002
    %v2136 = vpop.f32.mrb[0].mxu0
    %v2137 = vadd.f32 0.0, %v2136
    %v2138 = vpop.f32.mrb[0].mxu0
    %v2139 = vpop.f32.mrb[0].mxu0
    %v2140 = vadd.f32 0.0, %v2139
    %v2141 = vpop.f32.mrb[0].mxu0
    %2142 = vmatprep.mubr.bf16.mxu0 0
    %2143 = vmatmul.mubr.bf16.gmra.mrb[0].mxu0 %v2003
    %v2144 = vpop.f32.mrb[0].mxu0
    %v2145 = vadd.f32 0.0, %v2144
    %v2146 = vpop.f32.mrb[0].mxu0
    %v2147 = vpop.f32.mrb[0].mxu0
    %v2148 = vadd.f32 0.0, %v2147
    %v2149 = vpop.f32.mrb[0].mxu0
    %2150 = vmatprep.mubr.bf16.mxu0 0
    %2151 = vmatmul.mubr.bf16.gmra.mrb[0].mxu0 %v2004
    %v2152 = vpop.f32.mrb[0].mxu0
    %v2153 = vadd.f32 0.0, %v2152
    %v2154 = vpop.f32.mrb[0].mxu0
    %v2155 = vpop.f32.mrb[0].mxu0
    %v2156 = vadd.f32 0.0, %v2155
    %v2157 = vpop.f32.mrb[0].mxu0
    %2158 = vmatprep.mubr.bf16.mxu0 0
    %2159 = vmatmul.mubr.bf16.gmra.mrb[0].mxu0 %v2005
    %v2160 = vpop.f32.mrb[0].mxu0
    %v2161 = vadd.f32 0.0, %v2160
    %v2162 = vpop.f32.mrb[0].mxu0
    %v2163 = vpop.f32.mrb[0].mxu0
    %v2164 = vadd.f32 0.0, %v2163
    %v2165 = vpop.f32.mrb[0].mxu0
    %2166 = vdwg.mxu0
    %v2167 = vld [vmem:[%s8] sm:$0x1]
    %v2169 = vlaneseq
    %v2170 = vshrl.u32 %v2169, 7
    %v2171 = vsub.s32 0, %v2170
    %v2172 = vrot.slane %v2167, %v2171
    %v2174 = vmul.f32 %v2105, %v2172
    %v2175 = vmul.f32 %v2108, %v2172
    %v2176 = vmul.f32 %v2113, %v2172
    %v2177 = vmul.f32 %v2116, %v2172
    %v2178 = vmul.f32 %v2121, %v2172
    %v2179 = vmul.f32 %v2124, %v2172
    %v2180 = vmul.f32 %v2129, %v2172
    %v2181 = vmul.f32 %v2132, %v2172
    %v2182 = vmul.f32 %v2137, %v2172
    %v2183 = vmul.f32 %v2140, %v2172
    %v2184 = vmul.f32 %v2145, %v2172
    %v2185 = vmul.f32 %v2148, %v2172
    %v2186 = vmul.f32 %v2153, %v2172
    %v2187 = vmul.f32 %v2156, %v2172
    %v2188 = vmul.f32 %v2161, %v2172
    %v2189 = vmul.f32 %v2164, %v2172
    %v2190 = vld [vmem:[%s9] sm:$0x1]
    %v2192 = vlaneseq
    %v2193 = vshrl.u32 %v2192, 7
    %v2194 = vsub.s32 0, %v2193
    %v2195 = vrot.slane %v2190, %v2194
    %v2197 = vadd.f32 %v2174, %v2195
    %v2198 = vadd.f32 %v2175, %v2195
    %v2199 = vadd.f32 %v2176, %v2195
    %v2200 = vadd.f32 %v2177, %v2195
    %v2201 = vadd.f32 %v2178, %v2195
    %v2202 = vadd.f32 %v2179, %v2195
    %v2203 = vadd.f32 %v2180, %v2195
    %v2204 = vadd.f32 %v2181, %v2195
    %v2205 = vadd.f32 %v2182, %v2195
    %v2206 = vadd.f32 %v2183, %v2195
    %v2207 = vadd.f32 %v2184, %v2195
    %v2208 = vadd.f32 %v2185, %v2195
    %v2209 = vadd.f32 %v2186, %v2195
    %v2210 = vadd.f32 %v2187, %v2195
    %v2211 = vadd.f32 %v2188, %v2195
    %v2212 = vadd.f32 %v2189, %v2195
    %v2213 = vadd.f32 %v2197, %v92
    %v2214 = vadd.f32 %v2198, %v93
    %v2215 = vadd.f32 %v2199, %v94
    %v2216 = vadd.f32 %v2200, %v95
    %v2217 = vadd.f32 %v2201, %v96
    %v2218 = vadd.f32 %v2202, %v97
    %v2219 = vadd.f32 %v2203, %v98
    %v2220 = vadd.f32 %v2204, %v99
    %v2221 = vadd.f32 %v2205, %v100
    %v2222 = vadd.f32 %v2206, %v101
    %v2223 = vadd.f32 %v2207, %v102
    %v2224 = vadd.f32 %v2208, %v103
    %v2225 = vadd.f32 %v2209, %v104
    %v2226 = vadd.f32 %v2210, %v105
    %v2227 = vadd.f32 %v2211, %v106
    %v2228 = vadd.f32 %v2212, %v107
    %v2229 = vmax.f32 %v2213, 0.0
    %v2230 = vmax.f32 %v2214, 0.0
    %v2231 = vmax.f32 %v2215, 0.0
    %v2232 = vmax.f32 %v2216, 0.0
    %v2233 = vmax.f32 %v2217, 0.0
    %v2234 = vmax.f32 %v2218, 0.0
    %v2235 = vmax.f32 %v2219, 0.0
    %v2236 = vmax.f32 %v2220, 0.0
    %v2237 = vmax.f32 %v2221, 0.0
    %v2238 = vmax.f32 %v2222, 0.0
    %v2239 = vmax.f32 %v2223, 0.0
    %v2240 = vmax.f32 %v2224, 0.0
    %v2241 = vmax.f32 %v2225, 0.0
    %v2242 = vmax.f32 %v2226, 0.0
    %v2243 = vmax.f32 %v2227, 0.0
    %v2244 = vmax.f32 %v2228, 0.0
    %2245 = vst [vmem:[#allocation10] sm:$0xff] %v2229
    %2246 = vst [vmem:[#allocation10 + $0x8] sm:$0xff] %v2230
    %2247 = vst [vmem:[#allocation10 + $0x10] sm:$0xff] %v2231
    %2248 = vst [vmem:[#allocation10 + $0x18] sm:$0xff] %v2232
    %2249 = vst [vmem:[#allocation10 + $0x20] sm:$0xff] %v2233
    %2250 = vst [vmem:[#allocation10 + $0x28] sm:$0xff] %v2234
    %2251 = vst [vmem:[#allocation10 + $0x30] sm:$0xff] %v2235
    %2252 = vst [vmem:[#allocation10 + $0x38] sm:$0xff] %v2236
    %2253 = vst [vmem:[#allocation10 + $0x40] sm:$0xff] %v2237
    %2254 = vst [vmem:[#allocation10 + $0x48] sm:$0xff] %v2238
    %2255 = vst [vmem:[#allocation10 + $0x50] sm:$0xff] %v2239
    %2256 = vst [vmem:[#allocation10 + $0x58] sm:$0xff] %v2240
    %2257 = vst [vmem:[#allocation10 + $0x60] sm:$0xff] %v2241
    %2258 = vst [vmem:[#allocation10 + $0x68] sm:$0xff] %v2242
    %2259 = vst [vmem:[#allocation10 + $0x70] sm:$0xff] %v2243
    %2260 = vst [vmem:[#allocation10 + $0x78] sm:$0xff] %v2244
    // Predicated region
    $region58: #{tpu_custom_call.1} parent=1 // pred_check
      _
    $region59: #{tpu_custom_call.1} parent=1 // pred_check_branch
      %2262 = sbr.rel (0) target = $region61
    $region60: #{tpu_custom_call.1} parent=1 // pred_region
      %s2264 = ssub.s32 2048, 2048
      %2265 = vsyncadd [#allocation4], %s2264
      %s2266 = sshll.u32 [#allocation10], 4
      %s2267 = int_to_ptr.vmem [resolvable:$true] %s2266
      %2272 = dma.vmem_to_hbm [thread:$0]  %s2267, 2048, %s10, [#allocation4], 128, 128, 8
    $region61: #{tpu_custom_call.1} parent=1 // pred_fallthru
      _
    // Predicated region
    $region62: #{tpu_custom_call.1} parent=1 // pred_check
      _
    $region63: #{tpu_custom_call.1} parent=1 // pred_check_branch
      %2274 = sbr.rel (0) target = $region65
    $region64: #{tpu_custom_call.1} parent=1 // pred_region
      %2275 = dma.done [#allocation4], 2048
    $region65: #{tpu_custom_call.1} parent=1 // pred_fallthru
      _
    %2276 = vsyncpa [#allocation3], 1
    %2277 = vsyncpa [#allocation6], 1
    %2278 = vsyncpa [#allocation9], 1
    %2279 = vsyncpa [#allocation4], 1

</llo_original>
